<compile_context>
chip_gen: v7x
topology: tpu7x:2x2x1
jax: 0.10.0
libtpu: 0.0.40
codegen_flags: <defaults>
</compile_context>

<pallas_src>
import math

import numpy as np

import jax
import jax.numpy as jnp
from jax import lax
from jax.experimental import pallas as pl
from jax.experimental.pallas import tpu as pltpu


# --------------------------------------------------------------------------
# Kernel factory: fused GraphConv (all branches, all layers) for one block of
# Bb graph instances, feature-major layout (rows = feature dim, lanes = Bb*N).
# --------------------------------------------------------------------------
def make_graph_conv_kernel(num_branches, num_layers, agg_first, use_bf16_matmul=True):
    """agg_first: tuple[bool] per layer -- aggregate before the linear."""
    mm_dtype = jnp.bfloat16 if use_bf16_matmul else jnp.float32

    def kernel(*refs):
        # refs layout (inputs in order, then the single output):
        #   [0]                     x_ref    (D1, Bb*N)         f32
        #   [1 : 1+nb]              adjacency blockdiag kron(I_Bb, A^T)
        #                                    (Bb*N, Bb*N)       mm_dtype
        #   [1+nb : 1+nb+2*nb*nl]   per branch, per layer: (w, b)
        #                             w: (F_out, D_in) mm_dtype (torch layout)
        #                             b: (F_out, 1)    f32
        #   [-1]                    out_ref  (F_last, Bb*N)     f32
        x_ref = refs[0]
        adj_refs = refs[1:1 + num_branches]
        wb_refs = refs[1 + num_branches:-1]
        out_ref = refs[-1]

        # Cast the shared input once; re-used by every branch.
        x = x_ref[...].astype(mm_dtype)                    # (D1, Bb*N)

        acc = None
        wb_i = 0
        for br in range(num_branches):
            a_blk = adj_refs[br][...]                      # (Bb*N, Bb*N)
            h = x                                          # (D_in, Bb*N) mm_dtype
            for l in range(num_layers):
                w = wb_refs[wb_i][...]                     # (F, D_in) mm_dtype
                b = wb_refs[wb_i + 1][...]                 # (F, 1)    f32
                wb_i += 2

                if agg_first[l]:
                    # (A @ X) then W: cheaper when F_out > D_in (torch order).
                    g = jnp.dot(h, a_blk,
                                preferred_element_type=jnp.float32)
                    z = jnp.dot(w, g.astype(mm_dtype),
                                preferred_element_type=jnp.float32)
                else:
                    # W first, then the shared aggregation (exact reassociation).
                    g = jnp.dot(w, h,
                                preferred_element_type=jnp.float32)
                    z = jnp.dot(g.astype(mm_dtype), a_blk,
                                preferred_element_type=jnp.float32)

                # bias (broadcast along lanes) + ReLU in f32 on the VPU.
                hf = jnp.maximum(z + b, 0.0)               # (F, Bb*N) f32
                if l + 1 < num_layers:
                    h = hf.astype(mm_dtype)                # one cast per layer

            acc = hf if acc is None else acc + hf          # branch sum in f32

        out_ref[...] = acc.astype(out_ref.dtype)           # lane-dense store

    return kernel


# --------------------------------------------------------------------------
# Block-size policy: Bb instances per grid step such that Bb*N (the lane dim
# of every block) is a multiple of 128, targeting ~256 lanes per step.
# --------------------------------------------------------------------------
def _lane_step(N):
    return 128 // math.gcd(N, 128)          # smallest Bb with Bb*N % 128 == 0


def _pick_block_bt(BT, N):
    step = _lane_step(N)
    if (BT * N) % 128 == 0 and BT * N <= 512:
        return BT                            # one lane-aligned step (v5e/v6e)
    bb = max(1, 256 // N)
    return -(-bb // step) * step             # round up to lane alignment


# --------------------------------------------------------------------------
# Wrapper: layout prep (feature-major x, block-diag adjacency, torch weights),
# BlockSpec plumbing, zero-padding of batch*T, and the exact PyTorch
# view/permute chain on the output.
# --------------------------------------------------------------------------
def graph_conv_forward(graph_feature, road_adj, risk_adj, poi_adj, params,
                       north_south_map=None, west_east_map=None,
                       *, block_bt=None, use_bf16_matmul=True):
    """Pallas port of GraphConv.forward.

    graph_feature: (B, T, D1, N) float32
    *_adj:         (N, N) float32 (poi_adj may be None)
    params:        dict with '<branch>_w' / '<branch>_b' lists in torch
                   nn.Linear layout (w: (F_out, D_in), b: (F_out,))
    returns:       (B, T, F_last, N) float32
    (north_south_map / west_east_map are accepted for interface parity but,
     exactly as in the PyTorch module, unused by forward.)
    """
    del north_south_map, west_east_map
    B, T, D1, N = graph_feature.shape
    BT = B * T
    mm_dtype = jnp.bfloat16 if use_bf16_matmul else jnp.float32

    branches = ['road', 'risk']
    adjs = [road_adj, risk_adj]
    if poi_adj is not None:
        branches.append('poi')
        adjs.append(poi_adj)
    nb = len(branches)
    filters = [int(w.shape[0]) for w in params['road_w']]
    nl = len(filters)
    f_last = filters[-1]

    # Per-layer matmul order (static): aggregate first when it is cheaper.
    dims_in = [D1] + filters[:-1]
    agg_first = tuple(f > d for d, f in zip(dims_in, filters))

    # Feature-major input: x_fm[d, bt*N + n] = graph_feature[b, t, d, n].
    x_fm = (graph_feature.reshape(BT, D1, N)
                         .transpose(1, 0, 2)
                         .reshape(D1, BT * N)
                         .astype(jnp.float32))

    # Block size (instances per grid step), lane-aligned; pad BT if needed.
    if block_bt is None:
        Bb = _pick_block_bt(BT, N)
    else:
        step = _lane_step(N)
        Bb = -(-int(block_bt) // step) * step
    n_steps = -(-BT // Bb)                  # cdiv
    BT_pad = n_steps * Bb
    if BT_pad != BT:
        x_fm = jnp.pad(x_fm, ((0, 0), (0, (BT_pad - BT) * N)))
    cols = Bb * N                           # lane dim of every block

    args = [x_fm]
    in_specs = [pl.BlockSpec((D1, cols), lambda i: (0, i))]

    # Block-diagonal adjacency: kron(I_Bb, A^T), so that
    # (h @ a_blk)[d, b*N+m] = sum_n h[d, b*N+n] * A[m, n]  (per-instance A @ X).
    eye = jnp.eye(Bb, dtype=jnp.float32)
    for a in adjs:
        a = jnp.asarray(a, jnp.float32)
        a_blk = jnp.kron(eye, a.T).astype(mm_dtype)        # (Bb*N, Bb*N)
        args.append(a_blk)
        in_specs.append(pl.BlockSpec(a_blk.shape, lambda i: (0, 0)))

    for br in branches:
        for w, b in zip(params[br + '_w'], params[br + '_b']):
            wm = jnp.asarray(w, jnp.float32).astype(mm_dtype)   # (F, D_in)
            bc = jnp.asarray(b, jnp.float32).reshape(-1, 1)     # (F, 1)
            args.append(wm)
            in_specs.append(pl.BlockSpec(wm.shape, lambda i: (0, 0)))
            args.append(bc)
            in_specs.append(pl.BlockSpec(bc.shape, lambda i: (0, 0)))

    kernel = make_graph_conv_kernel(nb, nl, agg_first, use_bf16_matmul)
    out_fm = pl.pallas_call(
        kernel,
        out_shape=jax.ShapeDtypeStruct((f_last, BT_pad * N), jnp.float32),
        grid=(n_steps,),
        in_specs=in_specs,
        out_specs=pl.BlockSpec((f_last, cols), lambda i: (0, i)),
        compiler_params=pltpu.CompilerParams(
            dimension_semantics=("parallel",)),
    )(*args)

    out_fm = out_fm[:, :BT * N]             # drop zero-padding, if any

    # torch: view(B,T,N,F).permute(0,2,1,3).contiguous().view(B*N,T,F).view(B,T,F,N)
    return (out_fm.reshape(f_last, B, T, N)
                  .transpose(1, 3, 2, 0)     # (B, N, T, F), torch's contiguous order
                  .reshape(B, T, f_last, N))


# --------------------------------------------------------------------------
# Synthetic torch-layout parameters (deterministic).
# --------------------------------------------------------------------------
def init_params(key, num_of_graph_feature, nums_of_graph_filters):
    params = {}
    keys = jax.random.split(key, 6 * len(nums_of_graph_filters))
    ki = 0
    for br in ('road', 'risk', 'poi'):
        ws, bs = [], []
        d_in = num_of_graph_feature
        for f in nums_of_graph_filters:
            ws.append(jax.random.normal(keys[ki], (f, d_in), jnp.float32) * 0.1)
            ki += 1
            bs.append(jax.random.normal(keys[ki], (f,), jnp.float32) * 0.02)
            ki += 1
            d_in = f
        params[br + '_w'] = ws
        params[br + '_b'] = bs
    return params


# --------------------------------------------------------------------------
# Pure-JAX f32 reference (exact PyTorch math / op order) for correctness.
# --------------------------------------------------------------------------
def reference_forward(graph_feature, road_adj, risk_adj, poi_adj, params):
    B, T, D1, N = graph_feature.shape
    x = graph_feature.reshape(B * T, D1, N).transpose(0, 2, 1)  # (BT, N, D1)

    def branch(adj, ws, bs):
        h = x
        for w, b in zip(ws, bs):
            h = jnp.einsum('mn,bnd->bmd', adj, h,
                           precision=lax.Precision.HIGHEST)       # bmm(adj, h)
            h = jax.nn.relu(
                jnp.einsum('bnd,fd->bnf', h, w,
                           precision=lax.Precision.HIGHEST) + b)  # Linear+ReLU
        return h

    out = branch(road_adj, params['road_w'], params['road_b'])
    out = out + branch(risk_adj, params['risk_w'], params['risk_b'])
    if poi_adj is not None:
        out = out + branch(poi_adj, params['poi_w'], params['poi_b'])
    f_last = out.shape[-1]
    return (out.reshape(B, T, N, f_last)
               .transpose(0, 2, 1, 3)
               .reshape(B, T, f_last, N))


if __name__ == "__main__":
    # Small shapes consistent with the module.
    B, T, D1, N = 2, 8, 16, 16            # batch, seq_len, graph feature dim, nodes
    nums_of_graph_filters = [64, 64]      # GCN filter widths
    NS, WE = 4, 4                         # north_south_map / west_east_map (unused in forward)

    key = jax.random.PRNGKey(0)
    kx, k1, k2, k3, kp = jax.random.split(key, 5)
    graph_feature = jax.random.normal(kx, (B, T, D1, N), jnp.float32)
    road_adj = (jax.random.uniform(k1, (N, N)) > 0.5).astype(jnp.float32)
    risk_adj = (jax.random.uniform(k2, (N, N)) > 0.5).astype(jnp.float32)
    poi_adj = (jax.random.uniform(k3, (N, N)) > 0.5).astype(jnp.float32)
    params = init_params(kp, D1, nums_of_graph_filters)

    # Performance configuration: bf16 MXU operands, f32 accumulation, default
    # blocking (single 256-lane step here).
    out = graph_conv_forward(graph_feature, road_adj, risk_adj, poi_adj,
                             params, NS, WE, use_bf16_matmul=True)
    out = jax.block_until_ready(out)
    assert out.shape == (B, T, nums_of_graph_filters[-1], N)

    # Strict-precision configuration (f32 matmuls) with block_bt=8 (2-step grid,
    # 128-lane blocks) for a tight semantic check of the multi-step path.
    out_f32 = graph_conv_forward(graph_feature, road_adj, risk_adj, poi_adj,
                                 params, NS, WE, block_bt=8,
                                 use_bf16_matmul=False)
    out_f32 = jax.block_until_ready(out_f32)

    ref = reference_forward(graph_feature, road_adj, risk_adj, poi_adj, params)

    # 1) f32 kernel path must match the PyTorch-order f32 reference tightly
    #    (only matmul-reassociation / summation-order differences remain).
    np.testing.assert_allclose(np.asarray(out_f32), np.asarray(ref),
                               rtol=1e-4, atol=1e-5)
    # 2) bf16 (perf) path: bound the quantization error in a norm sense
    #    (bf16 operands through 2 GCN layers x 3 branches, f32 accumulation).
    rel = float(jnp.linalg.norm(out - ref) / jnp.linalg.norm(ref))
    assert rel < 3e-2, f"bf16 path relative error too large: {rel}"

    print("KERNEL_OK")
</pallas_src>

<mosaic_0001>
module attributes {stable_mosaic.version = 11 : i64} {
  func.func @kernel(%arg0: i32, %arg1: memref<16x256xf32, #tpu.memory_space<vmem>>, %arg2: memref<256x256xbf16, #tpu.memory_space<vmem>>, %arg3: memref<256x256xbf16, #tpu.memory_space<vmem>>, %arg4: memref<256x256xbf16, #tpu.memory_space<vmem>>, %arg5: memref<64x16xbf16, #tpu.memory_space<vmem>>, %arg6: memref<64x1xf32, #tpu.memory_space<vmem>>, %arg7: memref<64x64xbf16, #tpu.memory_space<vmem>>, %arg8: memref<64x1xf32, #tpu.memory_space<vmem>>, %arg9: memref<64x16xbf16, #tpu.memory_space<vmem>>, %arg10: memref<64x1xf32, #tpu.memory_space<vmem>>, %arg11: memref<64x64xbf16, #tpu.memory_space<vmem>>, %arg12: memref<64x1xf32, #tpu.memory_space<vmem>>, %arg13: memref<64x16xbf16, #tpu.memory_space<vmem>>, %arg14: memref<64x1xf32, #tpu.memory_space<vmem>>, %arg15: memref<64x64xbf16, #tpu.memory_space<vmem>>, %arg16: memref<64x1xf32, #tpu.memory_space<vmem>>, %arg17: memref<64x256xf32, #tpu.memory_space<vmem>>) attributes {dimension_semantics = [#tpu.dimension_semantics<parallel>], iteration_bounds = array<i64: 1>, scalar_prefetch = 0 : i64, scratch_operands = 0 : i64, tpu.core_type = #tpu.core_type<tc>, window_params = [{transform_indices = @transform_0, window_bounds = array<i64: 16, 256>}, {pipeline_mode = #tpu.pipeline_mode<synchronous>, transform_indices = @transform_1, window_bounds = array<i64: 256, 256>}, {pipeline_mode = #tpu.pipeline_mode<synchronous>, transform_indices = @transform_2, window_bounds = array<i64: 256, 256>}, {pipeline_mode = #tpu.pipeline_mode<synchronous>, transform_indices = @transform_3, window_bounds = array<i64: 256, 256>}, {pipeline_mode = #tpu.pipeline_mode<synchronous>, transform_indices = @transform_4, window_bounds = array<i64: 64, 16>}, {pipeline_mode = #tpu.pipeline_mode<synchronous>, transform_indices = @transform_5, window_bounds = array<i64: 64, 1>}, {pipeline_mode = #tpu.pipeline_mode<synchronous>, transform_indices = @transform_6, window_bounds = array<i64: 64, 64>}, {pipeline_mode = #tpu.pipeline_mode<synchronous>, transform_indices = @transform_7, window_bounds = array<i64: 64, 1>}, {pipeline_mode = #tpu.pipeline_mode<synchronous>, transform_indices = @transform_8, window_bounds = array<i64: 64, 16>}, {pipeline_mode = #tpu.pipeline_mode<synchronous>, transform_indices = @transform_9, window_bounds = array<i64: 64, 1>}, {pipeline_mode = #tpu.pipeline_mode<synchronous>, transform_indices = @transform_10, window_bounds = array<i64: 64, 64>}, {pipeline_mode = #tpu.pipeline_mode<synchronous>, transform_indices = @transform_11, window_bounds = array<i64: 64, 1>}, {pipeline_mode = #tpu.pipeline_mode<synchronous>, transform_indices = @transform_12, window_bounds = array<i64: 64, 16>}, {pipeline_mode = #tpu.pipeline_mode<synchronous>, transform_indices = @transform_13, window_bounds = array<i64: 64, 1>}, {pipeline_mode = #tpu.pipeline_mode<synchronous>, transform_indices = @transform_14, window_bounds = array<i64: 64, 64>}, {pipeline_mode = #tpu.pipeline_mode<synchronous>, transform_indices = @transform_15, window_bounds = array<i64: 64, 1>}, {transform_indices = @transform_16, window_bounds = array<i64: 64, 256>}]} {
    %c0 = arith.constant 0 : index
    %c0_0 = arith.constant 0 : index
    %0 = vector.load %arg1[%c0, %c0_0] : memref<16x256xf32, #tpu.memory_space<vmem>>, vector<16x256xf32>
    %1 = arith.truncf %0 : vector<16x256xf32> to vector<16x256xbf16>
    %c0_1 = arith.constant 0 : index
    %c0_2 = arith.constant 0 : index
    %2 = vector.load %arg2[%c0_1, %c0_2] : memref<256x256xbf16, #tpu.memory_space<vmem>>, vector<256x256xbf16>
    %c0_3 = arith.constant 0 : index
    %c0_4 = arith.constant 0 : index
    %3 = vector.load %arg5[%c0_3, %c0_4] : memref<64x16xbf16, #tpu.memory_space<vmem>>, vector<64x16xbf16>
    %c0_5 = arith.constant 0 : index
    %c0_6 = arith.constant 0 : index
    %4 = vector.load %arg6[%c0_5, %c0_6] : memref<64x1xf32, #tpu.memory_space<vmem>>, vector<64x1xf32>
    %cst = arith.constant dense<0.000000e+00> : vector<16x256xf32>
    %5 = tpu.matmul %1, %2, %cst {dimension_numbers = #tpu.dot_dimension_numbers<[1], [0], [0], [1], [0, 0, 1, 1], [], []>} : vector<16x256xbf16>, vector<256x256xbf16>, vector<16x256xf32> -> vector<16x256xf32>
    %6 = arith.truncf %5 : vector<16x256xf32> to vector<16x256xbf16>
    %cst_7 = arith.constant dense<0.000000e+00> : vector<64x256xf32>
    %7 = tpu.matmul %3, %6, %cst_7 {dimension_numbers = #tpu.dot_dimension_numbers<[1], [0], [0], [1], [0, 0, 1, 1], [], []>} : vector<64x16xbf16>, vector<16x256xbf16>, vector<64x256xf32> -> vector<64x256xf32>
    %8 = vector.broadcast %4 : vector<64x1xf32> to vector<64x256xf32>
    %9 = arith.addf %7, %8 : vector<64x256xf32>
    %cst_8 = arith.constant 0.000000e+00 : f32
    %10 = vector.broadcast %cst_8 : f32 to vector<64x256xf32>
    %11 = arith.maximumf %9, %10 : vector<64x256xf32>
    %12 = arith.truncf %11 : vector<64x256xf32> to vector<64x256xbf16>
    %c0_9 = arith.constant 0 : index
    %c0_10 = arith.constant 0 : index
    %13 = vector.load %arg7[%c0_9, %c0_10] : memref<64x64xbf16, #tpu.memory_space<vmem>>, vector<64x64xbf16>
    %c0_11 = arith.constant 0 : index
    %c0_12 = arith.constant 0 : index
    %14 = vector.load %arg8[%c0_11, %c0_12] : memref<64x1xf32, #tpu.memory_space<vmem>>, vector<64x1xf32>
    %cst_13 = arith.constant dense<0.000000e+00> : vector<64x256xf32>
    %15 = tpu.matmul %13, %12, %cst_13 {dimension_numbers = #tpu.dot_dimension_numbers<[1], [0], [0], [1], [0, 0, 1, 1], [], []>} : vector<64x64xbf16>, vector<64x256xbf16>, vector<64x256xf32> -> vector<64x256xf32>
    %16 = arith.truncf %15 : vector<64x256xf32> to vector<64x256xbf16>
    %cst_14 = arith.constant dense<0.000000e+00> : vector<64x256xf32>
    %17 = tpu.matmul %16, %2, %cst_14 {dimension_numbers = #tpu.dot_dimension_numbers<[1], [0], [0], [1], [0, 0, 1, 1], [], []>} : vector<64x256xbf16>, vector<256x256xbf16>, vector<64x256xf32> -> vector<64x256xf32>
    %18 = vector.broadcast %14 : vector<64x1xf32> to vector<64x256xf32>
    %19 = arith.addf %17, %18 : vector<64x256xf32>
    %cst_15 = arith.constant 0.000000e+00 : f32
    %20 = vector.broadcast %cst_15 : f32 to vector<64x256xf32>
    %21 = arith.maximumf %19, %20 : vector<64x256xf32>
    %c0_16 = arith.constant 0 : index
    %c0_17 = arith.constant 0 : index
    %22 = vector.load %arg3[%c0_16, %c0_17] : memref<256x256xbf16, #tpu.memory_space<vmem>>, vector<256x256xbf16>
    %c0_18 = arith.constant 0 : index
    %c0_19 = arith.constant 0 : index
    %23 = vector.load %arg9[%c0_18, %c0_19] : memref<64x16xbf16, #tpu.memory_space<vmem>>, vector<64x16xbf16>
    %c0_20 = arith.constant 0 : index
    %c0_21 = arith.constant 0 : index
    %24 = vector.load %arg10[%c0_20, %c0_21] : memref<64x1xf32, #tpu.memory_space<vmem>>, vector<64x1xf32>
    %cst_22 = arith.constant dense<0.000000e+00> : vector<16x256xf32>
    %25 = tpu.matmul %1, %22, %cst_22 {dimension_numbers = #tpu.dot_dimension_numbers<[1], [0], [0], [1], [0, 0, 1, 1], [], []>} : vector<16x256xbf16>, vector<256x256xbf16>, vector<16x256xf32> -> vector<16x256xf32>
    %26 = arith.truncf %25 : vector<16x256xf32> to vector<16x256xbf16>
    %cst_23 = arith.constant dense<0.000000e+00> : vector<64x256xf32>
    %27 = tpu.matmul %23, %26, %cst_23 {dimension_numbers = #tpu.dot_dimension_numbers<[1], [0], [0], [1], [0, 0, 1, 1], [], []>} : vector<64x16xbf16>, vector<16x256xbf16>, vector<64x256xf32> -> vector<64x256xf32>
    %28 = vector.broadcast %24 : vector<64x1xf32> to vector<64x256xf32>
    %29 = arith.addf %27, %28 : vector<64x256xf32>
    %cst_24 = arith.constant 0.000000e+00 : f32
    %30 = vector.broadcast %cst_24 : f32 to vector<64x256xf32>
    %31 = arith.maximumf %29, %30 : vector<64x256xf32>
    %32 = arith.truncf %31 : vector<64x256xf32> to vector<64x256xbf16>
    %c0_25 = arith.constant 0 : index
    %c0_26 = arith.constant 0 : index
    %33 = vector.load %arg11[%c0_25, %c0_26] : memref<64x64xbf16, #tpu.memory_space<vmem>>, vector<64x64xbf16>
    %c0_27 = arith.constant 0 : index
    %c0_28 = arith.constant 0 : index
    %34 = vector.load %arg12[%c0_27, %c0_28] : memref<64x1xf32, #tpu.memory_space<vmem>>, vector<64x1xf32>
    %cst_29 = arith.constant dense<0.000000e+00> : vector<64x256xf32>
    %35 = tpu.matmul %33, %32, %cst_29 {dimension_numbers = #tpu.dot_dimension_numbers<[1], [0], [0], [1], [0, 0, 1, 1], [], []>} : vector<64x64xbf16>, vector<64x256xbf16>, vector<64x256xf32> -> vector<64x256xf32>
    %36 = arith.truncf %35 : vector<64x256xf32> to vector<64x256xbf16>
    %cst_30 = arith.constant dense<0.000000e+00> : vector<64x256xf32>
    %37 = tpu.matmul %36, %22, %cst_30 {dimension_numbers = #tpu.dot_dimension_numbers<[1], [0], [0], [1], [0, 0, 1, 1], [], []>} : vector<64x256xbf16>, vector<256x256xbf16>, vector<64x256xf32> -> vector<64x256xf32>
    %38 = vector.broadcast %34 : vector<64x1xf32> to vector<64x256xf32>
    %39 = arith.addf %37, %38 : vector<64x256xf32>
    %cst_31 = arith.constant 0.000000e+00 : f32
    %40 = vector.broadcast %cst_31 : f32 to vector<64x256xf32>
    %41 = arith.maximumf %39, %40 : vector<64x256xf32>
    %42 = arith.addf %21, %41 : vector<64x256xf32>
    %c0_32 = arith.constant 0 : index
    %c0_33 = arith.constant 0 : index
    %43 = vector.load %arg4[%c0_32, %c0_33] : memref<256x256xbf16, #tpu.memory_space<vmem>>, vector<256x256xbf16>
    %c0_34 = arith.constant 0 : index
    %c0_35 = arith.constant 0 : index
    %44 = vector.load %arg13[%c0_34, %c0_35] : memref<64x16xbf16, #tpu.memory_space<vmem>>, vector<64x16xbf16>
    %c0_36 = arith.constant 0 : index
    %c0_37 = arith.constant 0 : index
    %45 = vector.load %arg14[%c0_36, %c0_37] : memref<64x1xf32, #tpu.memory_space<vmem>>, vector<64x1xf32>
    %cst_38 = arith.constant dense<0.000000e+00> : vector<16x256xf32>
    %46 = tpu.matmul %1, %43, %cst_38 {dimension_numbers = #tpu.dot_dimension_numbers<[1], [0], [0], [1], [0, 0, 1, 1], [], []>} : vector<16x256xbf16>, vector<256x256xbf16>, vector<16x256xf32> -> vector<16x256xf32>
    %47 = arith.truncf %46 : vector<16x256xf32> to vector<16x256xbf16>
    %cst_39 = arith.constant dense<0.000000e+00> : vector<64x256xf32>
    %48 = tpu.matmul %44, %47, %cst_39 {dimension_numbers = #tpu.dot_dimension_numbers<[1], [0], [0], [1], [0, 0, 1, 1], [], []>} : vector<64x16xbf16>, vector<16x256xbf16>, vector<64x256xf32> -> vector<64x256xf32>
    %49 = vector.broadcast %45 : vector<64x1xf32> to vector<64x256xf32>
    %50 = arith.addf %48, %49 : vector<64x256xf32>
    %cst_40 = arith.constant 0.000000e+00 : f32
    %51 = vector.broadcast %cst_40 : f32 to vector<64x256xf32>
    %52 = arith.maximumf %50, %51 : vector<64x256xf32>
    %53 = arith.truncf %52 : vector<64x256xf32> to vector<64x256xbf16>
    %c0_41 = arith.constant 0 : index
    %c0_42 = arith.constant 0 : index
    %54 = vector.load %arg15[%c0_41, %c0_42] : memref<64x64xbf16, #tpu.memory_space<vmem>>, vector<64x64xbf16>
    %c0_43 = arith.constant 0 : index
    %c0_44 = arith.constant 0 : index
    %55 = vector.load %arg16[%c0_43, %c0_44] : memref<64x1xf32, #tpu.memory_space<vmem>>, vector<64x1xf32>
    %cst_45 = arith.constant dense<0.000000e+00> : vector<64x256xf32>
    %56 = tpu.matmul %54, %53, %cst_45 {dimension_numbers = #tpu.dot_dimension_numbers<[1], [0], [0], [1], [0, 0, 1, 1], [], []>} : vector<64x64xbf16>, vector<64x256xbf16>, vector<64x256xf32> -> vector<64x256xf32>
    %57 = arith.truncf %56 : vector<64x256xf32> to vector<64x256xbf16>
    %cst_46 = arith.constant dense<0.000000e+00> : vector<64x256xf32>
    %58 = tpu.matmul %57, %43, %cst_46 {dimension_numbers = #tpu.dot_dimension_numbers<[1], [0], [0], [1], [0, 0, 1, 1], [], []>} : vector<64x256xbf16>, vector<256x256xbf16>, vector<64x256xf32> -> vector<64x256xf32>
    %59 = vector.broadcast %55 : vector<64x1xf32> to vector<64x256xf32>
    %60 = arith.addf %58, %59 : vector<64x256xf32>
    %cst_47 = arith.constant 0.000000e+00 : f32
    %61 = vector.broadcast %cst_47 : f32 to vector<64x256xf32>
    %62 = arith.maximumf %60, %61 : vector<64x256xf32>
    %63 = arith.addf %42, %62 : vector<64x256xf32>
    %c0_48 = arith.constant 0 : index
    %c0_49 = arith.constant 0 : index
    %64 = vector.load %arg17[%c0_48, %c0_49] : memref<64x256xf32, #tpu.memory_space<vmem>>, vector<64x256xf32>
    tpu.vector_store %arg17[%c0_48, %c0_49], %63 {strides = array<i32>} : memref<64x256xf32, #tpu.memory_space<vmem>>, vector<64x256xf32>,
    return
  }
  func.func @transform_0(%arg0: i32) -> (i32, i32) {
    %c0_i32 = arith.constant 0 : i32
    %c0_i32_0 = arith.constant 0 : i32
    return %c0_i32, %arg0 : i32, i32
  }
  func.func @transform_1(%arg0: i32) -> (i32, i32) {
    %c0_i32 = arith.constant 0 : i32
    %c0_i32_0 = arith.constant 0 : i32
    %c0_i32_1 = arith.constant 0 : i32
    return %c0_i32, %c0_i32_0 : i32, i32
  }
  func.func @transform_2(%arg0: i32) -> (i32, i32) {
    %c0_i32 = arith.constant 0 : i32
    %c0_i32_0 = arith.constant 0 : i32
    %c0_i32_1 = arith.constant 0 : i32
    return %c0_i32, %c0_i32_0 : i32, i32
  }
  func.func @transform_3(%arg0: i32) -> (i32, i32) {
    %c0_i32 = arith.constant 0 : i32
    %c0_i32_0 = arith.constant 0 : i32
    %c0_i32_1 = arith.constant 0 : i32
    return %c0_i32, %c0_i32_0 : i32, i32
  }
  func.func @transform_4(%arg0: i32) -> (i32, i32) {
    %c0_i32 = arith.constant 0 : i32
    %c0_i32_0 = arith.constant 0 : i32
    %c0_i32_1 = arith.constant 0 : i32
    return %c0_i32, %c0_i32_0 : i32, i32
  }
  func.func @transform_5(%arg0: i32) -> (i32, i32) {
    %c0_i32 = arith.constant 0 : i32
    %c0_i32_0 = arith.constant 0 : i32
    %c0_i32_1 = arith.constant 0 : i32
    return %c0_i32, %c0_i32_0 : i32, i32
  }
  func.func @transform_6(%arg0: i32) -> (i32, i32) {
    %c0_i32 = arith.constant 0 : i32
    %c0_i32_0 = arith.constant 0 : i32
    %c0_i32_1 = arith.constant 0 : i32
    return %c0_i32, %c0_i32_0 : i32, i32
  }
  func.func @transform_7(%arg0: i32) -> (i32, i32) {
    %c0_i32 = arith.constant 0 : i32
    %c0_i32_0 = arith.constant 0 : i32
    %c0_i32_1 = arith.constant 0 : i32
    return %c0_i32, %c0_i32_0 : i32, i32
  }
  func.func @transform_8(%arg0: i32) -> (i32, i32) {
    %c0_i32 = arith.constant 0 : i32
    %c0_i32_0 = arith.constant 0 : i32
    %c0_i32_1 = arith.constant 0 : i32
    return %c0_i32, %c0_i32_0 : i32, i32
  }
  func.func @transform_9(%arg0: i32) -> (i32, i32) {
    %c0_i32 = arith.constant 0 : i32
    %c0_i32_0 = arith.constant 0 : i32
    %c0_i32_1 = arith.constant 0 : i32
    return %c0_i32, %c0_i32_0 : i32, i32
  }
  func.func @transform_10(%arg0: i32) -> (i32, i32) {
    %c0_i32 = arith.constant 0 : i32
    %c0_i32_0 = arith.constant 0 : i32
    %c0_i32_1 = arith.constant 0 : i32
    return %c0_i32, %c0_i32_0 : i32, i32
  }
  func.func @transform_11(%arg0: i32) -> (i32, i32) {
    %c0_i32 = arith.constant 0 : i32
    %c0_i32_0 = arith.constant 0 : i32
    %c0_i32_1 = arith.constant 0 : i32
    return %c0_i32, %c0_i32_0 : i32, i32
  }
  func.func @transform_12(%arg0: i32) -> (i32, i32) {
    %c0_i32 = arith.constant 0 : i32
    %c0_i32_0 = arith.constant 0 : i32
    %c0_i32_1 = arith.constant 0 : i32
    return %c0_i32, %c0_i32_0 : i32, i32
  }
  func.func @transform_13(%arg0: i32) -> (i32, i32) {
    %c0_i32 = arith.constant 0 : i32
    %c0_i32_0 = arith.constant 0 : i32
    %c0_i32_1 = arith.constant 0 : i32
    return %c0_i32, %c0_i32_0 : i32, i32
  }
  func.func @transform_14(%arg0: i32) -> (i32, i32) {
    %c0_i32 = arith.constant 0 : i32
    %c0_i32_0 = arith.constant 0 : i32
    %c0_i32_1 = arith.constant 0 : i32
    return %c0_i32, %c0_i32_0 : i32, i32
  }
  func.func @transform_15(%arg0: i32) -> (i32, i32) {
    %c0_i32 = arith.constant 0 : i32
    %c0_i32_0 = arith.constant 0 : i32
    %c0_i32_1 = arith.constant 0 : i32
    return %c0_i32, %c0_i32_0 : i32, i32
  }
  func.func @transform_16(%arg0: i32) -> (i32, i32) {
    %c0_i32 = arith.constant 0 : i32
    %c0_i32_0 = arith.constant 0 : i32
    return %c0_i32, %arg0 : i32, i32
  }
}

</mosaic_0001>

<llo_original>
// kernel: tpu_custom_call.1
$region0: #{tpu_custom_call.1}
  #allocation0 [shape = 'u32[]', space=smem, size = 0x4, offset = 0x4, fixed_abs, tag = 'smem constant byte address 0x4 - core index']
  #allocation1 [shape = 'u32[144,128]{1,0:T(1,128)}', space=vmem, size = 0x12000, scoped, tag = 'internal scratch']
  %s0 = inlined_call_operand.hbm [shape: f32[16,256], index: 0, kind: input, shape index: {}]
  %s1 = inlined_call_operand.vmem [shape: bf16[256,256], index: 1, kind: input, shape index: {}]
  %s2 = inlined_call_operand.vmem [shape: bf16[256,256], index: 2, kind: input, shape index: {}]
  %s3 = inlined_call_operand.hbm [shape: bf16[256,256], index: 3, kind: input, shape index: {}]
  %s4 = inlined_call_operand.vmem [shape: bf16[64,16], index: 4, kind: input, shape index: {}]
  %s5 = inlined_call_operand.vmem [shape: f32[64,1], index: 5, kind: input, shape index: {}]
  %s6 = inlined_call_operand.hbm [shape: bf16[64,64], index: 6, kind: input, shape index: {}]
  %s7 = inlined_call_operand.vmem [shape: f32[64,1], index: 7, kind: input, shape index: {}]
  %s8 = inlined_call_operand.vmem [shape: bf16[64,16], index: 8, kind: input, shape index: {}]
  %s9 = inlined_call_operand.vmem [shape: f32[64,1], index: 9, kind: input, shape index: {}]
  %s10 = inlined_call_operand.vmem [shape: bf16[64,64], index: 10, kind: input, shape index: {}]
  %s11 = inlined_call_operand.vmem [shape: f32[64,1], index: 11, kind: input, shape index: {}]
  %s12 = inlined_call_operand.vmem [shape: bf16[64,16], index: 12, kind: input, shape index: {}]
  %s13 = inlined_call_operand.vmem [shape: f32[64,1], index: 13, kind: input, shape index: {}]
  %s14 = inlined_call_operand.hbm [shape: bf16[64,64], index: 14, kind: input, shape index: {}]
  %s15 = inlined_call_operand.vmem [shape: f32[64,1], index: 15, kind: input, shape index: {}]
  %s16 = inlined_call_operand.hbm [shape: f32[64,256], index: 16, kind: output, shape index: {}]
  %s17 = sld [smem:[#allocation0]]
  $region90: #{tpu_custom_call.1} parent=0
    _
  %s19 = ssub.s32 1, %s17
  %s20 = scalar_select 0, %s19, %s17
  $region1: #{tpu_custom_call.1} parent=0
    #allocation2 [shape = 'u8[16384]{0}', space=vmem, size = 0x4000, scoped, tag = 'input window, operand 0, single buffered']
    #allocation3 [shape = 's32[1]{0}', space=sflag, size = 0x4, scoped, tag = 'scoped memory for tpu_custom_call.1']
    #allocation4 [shape = 's32[1]{0}', space=sflag, size = 0x4, scoped, tag = 'scoped memory for tpu_custom_call.1']
    #allocation5 [shape = 'u8[131072]{0}', space=vmem, size = 0x20000, scoped, tag = 'input window, operand 3, single buffered']
    #allocation6 [shape = 's32[1]{0}', space=sflag, size = 0x4, scoped, tag = 'scoped memory for tpu_custom_call.1']
    #allocation7 [shape = 'u8[16384]{0}', space=vmem, size = 0x4000, scoped, tag = 'input window, operand 6, single buffered']
    #allocation8 [shape = 'u8[16384]{0}', space=vmem, size = 0x4000, scoped, tag = 'input window, operand 14, single buffered']
    #allocation9 [shape = 's32[1]{0}', space=sflag, size = 0x4, scoped, tag = 'scoped memory for tpu_custom_call.1']
    #allocation10 [shape = 'u8[65536]{0}', space=vmem, size = 0x10000, scoped, tag = 'output window, operand 0, single buffered']
    %21 = vsyncpa [#allocation3], 0
    %22 = vsyncpa [#allocation6], 0
    %23 = vsyncpa [#allocation9], 0
    %24 = vsyncpa [#allocation4], 0
    // Predicated region
    $region2: #{tpu_custom_call.1} parent=1 // pred_check
      _
    $region3: #{tpu_custom_call.1} parent=1 // pred_check_branch
      %26 = sbr.rel (0) target = $region5
    $region4: #{tpu_custom_call.1} parent=1 // pred_region
      %s28 = ssub.s32 512, 512
      %29 = vsyncadd [#allocation3], %s28
      %s30 = sshll.u32 [#allocation2], 4
      %s31 = int_to_ptr.vmem [resolvable:$true] %s30
      %36 = dma.hbm_to_vmem [thread:$0]  %s0, 512, %s31, [#allocation3], 256, 256, 16
    $region5: #{tpu_custom_call.1} parent=1 // pred_fallthru
      _
    // Predicated region
    $region6: #{tpu_custom_call.1} parent=1 // pred_check
      _
    $region7: #{tpu_custom_call.1} parent=1 // pred_check_branch
      %38 = sbr.rel (0) target = $region9
    $region8: #{tpu_custom_call.1} parent=1 // pred_region
      _
    $region9: #{tpu_custom_call.1} parent=1 // pred_fallthru
      _
    // Predicated region
    $region10: #{tpu_custom_call.1} parent=1 // pred_check
      _
    $region11: #{tpu_custom_call.1} parent=1 // pred_check_branch
      %40 = sbr.rel (0) target = $region13
    $region12: #{tpu_custom_call.1} parent=1 // pred_region
      _
    $region13: #{tpu_custom_call.1} parent=1 // pred_fallthru
      _
    // Predicated region
    $region14: #{tpu_custom_call.1} parent=1 // pred_check
      _
    $region15: #{tpu_custom_call.1} parent=1 // pred_check_branch
      %42 = sbr.rel (0) target = $region17
    $region16: #{tpu_custom_call.1} parent=1 // pred_region
      %s44 = ssub.s32 4096, 4096
      %45 = vsyncadd [#allocation6], %s44
      %s46 = sshll.u32 [#allocation5], 4
      %s47 = int_to_ptr.vmem [resolvable:$true] %s46
      %52 = dma.hbm_to_vmem [thread:$0]  %s3, 4096, %s47, [#allocation6], 128, 128, 8
    $region17: #{tpu_custom_call.1} parent=1 // pred_fallthru
      _
    // Predicated region
    $region18: #{tpu_custom_call.1} parent=1 // pred_check
      _
    $region19: #{tpu_custom_call.1} parent=1 // pred_check_branch
      %54 = sbr.rel (0) target = $region21
    $region20: #{tpu_custom_call.1} parent=1 // pred_region
      _
    $region21: #{tpu_custom_call.1} parent=1 // pred_fallthru
      _
    // Predicated region
    $region22: #{tpu_custom_call.1} parent=1 // pred_check
      _
    $region23: #{tpu_custom_call.1} parent=1 // pred_check_branch
      %56 = sbr.rel (0) target = $region25
    $region24: #{tpu_custom_call.1} parent=1 // pred_region
      _
    $region25: #{tpu_custom_call.1} parent=1 // pred_fallthru
      _
    // Predicated region
    $region26: #{tpu_custom_call.1} parent=1 // pred_check
      _
    $region27: #{tpu_custom_call.1} parent=1 // pred_check_branch
      %58 = sbr.rel (0) target = $region29
    $region28: #{tpu_custom_call.1} parent=1 // pred_region
      %s60 = ssub.s32 512, 512
      %61 = vsyncadd [#allocation6], %s60
      %s62 = sshll.u32 [#allocation7], 4
      %s63 = int_to_ptr.vmem [resolvable:$true] %s62
      %68 = dma.hbm_to_vmem [thread:$0]  %s6, 512, %s63, [#allocation6], 64, 64, 4
    $region29: #{tpu_custom_call.1} parent=1 // pred_fallthru
      _
    // Predicated region
    $region30: #{tpu_custom_call.1} parent=1 // pred_check
      _
    $region31: #{tpu_custom_call.1} parent=1 // pred_check_branch
      %70 = sbr.rel (0) target = $region33
    $region32: #{tpu_custom_call.1} parent=1 // pred_region
      _
    $region33: #{tpu_custom_call.1} parent=1 // pred_fallthru
      _
    // Predicated region
    $region34: #{tpu_custom_call.1} parent=1 // pred_check
      _
    $region35: #{tpu_custom_call.1} parent=1 // pred_check_branch
      %72 = sbr.rel (0) target = $region37
    $region36: #{tpu_custom_call.1} parent=1 // pred_region
      _
    $region37: #{tpu_custom_call.1} parent=1 // pred_fallthru
      _
    // Predicated region
    $region38: #{tpu_custom_call.1} parent=1 // pred_check
      _
    $region39: #{tpu_custom_call.1} parent=1 // pred_check_branch
      %74 = sbr.rel (0) target = $region41
    $region40: #{tpu_custom_call.1} parent=1 // pred_region
      _
    $region41: #{tpu_custom_call.1} parent=1 // pred_fallthru
      _
    // Predicated region
    $region42: #{tpu_custom_call.1} parent=1 // pred_check
      _
    $region43: #{tpu_custom_call.1} parent=1 // pred_check_branch
      %76 = sbr.rel (0) target = $region45
    $region44: #{tpu_custom_call.1} parent=1 // pred_region
      _
    $region45: #{tpu_custom_call.1} parent=1 // pred_fallthru
      _
    // Predicated region
    $region46: #{tpu_custom_call.1} parent=1 // pred_check
      _
    $region47: #{tpu_custom_call.1} parent=1 // pred_check_branch
      %78 = sbr.rel (0) target = $region49
    $region48: #{tpu_custom_call.1} parent=1 // pred_region
      _
    $region49: #{tpu_custom_call.1} parent=1 // pred_fallthru
      _
    // Predicated region
    $region50: #{tpu_custom_call.1} parent=1 // pred_check
      _
    $region51: #{tpu_custom_call.1} parent=1 // pred_check_branch
      %80 = sbr.rel (0) target = $region53
    $region52: #{tpu_custom_call.1} parent=1 // pred_region
      _
    $region53: #{tpu_custom_call.1} parent=1 // pred_fallthru
      _
    // Predicated region
    $region54: #{tpu_custom_call.1} parent=1 // pred_check
      _
    $region55: #{tpu_custom_call.1} parent=1 // pred_check_branch
      %82 = sbr.rel (0) target = $region57
    $region56: #{tpu_custom_call.1} parent=1 // pred_region
      _
    $region57: #{tpu_custom_call.1} parent=1 // pred_fallthru
      _
    // Predicated region
    $region58: #{tpu_custom_call.1} parent=1 // pred_check
      _
    $region59: #{tpu_custom_call.1} parent=1 // pred_check_branch
      %84 = sbr.rel (0) target = $region61
    $region60: #{tpu_custom_call.1} parent=1 // pred_region
      %s86 = ssub.s32 512, 512
      %87 = vsyncadd [#allocation9], %s86
      %s88 = sshll.u32 [#allocation8], 4
      %s89 = int_to_ptr.vmem [resolvable:$true] %s88
      %94 = dma.hbm_to_vmem [thread:$0]  %s14, 512, %s89, [#allocation9], 64, 64, 4
    $region61: #{tpu_custom_call.1} parent=1 // pred_fallthru
      _
    // Predicated region
    $region62: #{tpu_custom_call.1} parent=1 // pred_check
      _
    $region63: #{tpu_custom_call.1} parent=1 // pred_check_branch
      %96 = sbr.rel (0) target = $region65
    $region64: #{tpu_custom_call.1} parent=1 // pred_region
      _
    $region65: #{tpu_custom_call.1} parent=1 // pred_fallthru
      _
    // Predicated region
    $region66: #{tpu_custom_call.1} parent=1 // pred_check
      _
    $region67: #{tpu_custom_call.1} parent=1 // pred_check_branch
      %98 = sbr.rel (0) target = $region69
    $region68: #{tpu_custom_call.1} parent=1 // pred_region
      %99 = dma.done [#allocation3], 512
    $region69: #{tpu_custom_call.1} parent=1 // pred_fallthru
      _
    // Predicated region
    $region70: #{tpu_custom_call.1} parent=1 // pred_check
      _
    $region71: #{tpu_custom_call.1} parent=1 // pred_check_branch
      %101 = sbr.rel (0) target = $region73
    $region72: #{tpu_custom_call.1} parent=1 // pred_region
      %102 = dma.done [#allocation6], 4096
    $region73: #{tpu_custom_call.1} parent=1 // pred_fallthru
      _
    // Predicated region
    $region74: #{tpu_custom_call.1} parent=1 // pred_check
      _
    $region75: #{tpu_custom_call.1} parent=1 // pred_check_branch
      %104 = sbr.rel (0) target = $region77
    $region76: #{tpu_custom_call.1} parent=1 // pred_region
      %105 = dma.done [#allocation6], 512
    $region77: #{tpu_custom_call.1} parent=1 // pred_fallthru
      _
    // Predicated region
    $region78: #{tpu_custom_call.1} parent=1 // pred_check
      _
    $region79: #{tpu_custom_call.1} parent=1 // pred_check_branch
      %107 = sbr.rel (0) target = $region81
    $region80: #{tpu_custom_call.1} parent=1 // pred_region
      %108 = dma.done [#allocation9], 512
    $region81: #{tpu_custom_call.1} parent=1 // pred_fallthru
      _
    %v110 = vld [vmem:[#allocation2] sm:$0xff]
    %v111 = vld [vmem:[#allocation2 + $0x8] sm:$0xff]
    %v112 = vld [vmem:[#allocation2 + $0x10] sm:$0xff]
    %v113 = vld [vmem:[#allocation2 + $0x18] sm:$0xff]
    %v114 = vpack.c.bf16 %v112, %v110
    %v115 = vpack.c.bf16 %v113, %v111
    %v116 = vld [vmem:[%s1] sm:$0xff]
    %v117 = vld [vmem:[%s1 + $0x8] sm:$0xff]
    %v118 = vld [vmem:[%s1 + $0x10] sm:$0xff]
    %v119 = vld [vmem:[%s1 + $0x18] sm:$0xff]
    %v120 = vld [vmem:[%s1 + $0x20] sm:$0xff]
    %v121 = vld [vmem:[%s1 + $0x28] sm:$0xff]
    %v122 = vld [vmem:[%s1 + $0x30] sm:$0xff]
    %v123 = vld [vmem:[%s1 + $0x38] sm:$0xff]
    %v124 = vld [vmem:[%s1 + $0x40] sm:$0xff]
    %v125 = vld [vmem:[%s1 + $0x48] sm:$0xff]
    %v126 = vld [vmem:[%s1 + $0x50] sm:$0xff]
    %v127 = vld [vmem:[%s1 + $0x58] sm:$0xff]
    %v128 = vld [vmem:[%s1 + $0x60] sm:$0xff]
    %v129 = vld [vmem:[%s1 + $0x68] sm:$0xff]
    %v130 = vld [vmem:[%s1 + $0x70] sm:$0xff]
    %v131 = vld [vmem:[%s1 + $0x78] sm:$0xff]
    %v132 = vld [vmem:[%s1 + $0x80] sm:$0xff]
    %v133 = vld [vmem:[%s1 + $0x88] sm:$0xff]
    %v134 = vld [vmem:[%s1 + $0x90] sm:$0xff]
    %v135 = vld [vmem:[%s1 + $0x98] sm:$0xff]
    %v136 = vld [vmem:[%s1 + $0xa0] sm:$0xff]
    %v137 = vld [vmem:[%s1 + $0xa8] sm:$0xff]
    %v138 = vld [vmem:[%s1 + $0xb0] sm:$0xff]
    %v139 = vld [vmem:[%s1 + $0xb8] sm:$0xff]
    %v140 = vld [vmem:[%s1 + $0xc0] sm:$0xff]
    %v141 = vld [vmem:[%s1 + $0xc8] sm:$0xff]
    %v142 = vld [vmem:[%s1 + $0xd0] sm:$0xff]
    %v143 = vld [vmem:[%s1 + $0xd8] sm:$0xff]
    %v144 = vld [vmem:[%s1 + $0xe0] sm:$0xff]
    %v145 = vld [vmem:[%s1 + $0xe8] sm:$0xff]
    %v146 = vld [vmem:[%s1 + $0xf0] sm:$0xff]
    %v147 = vld [vmem:[%s1 + $0xf8] sm:$0xff]
    %v148 = vld [vmem:[%s4] sm:$0xf]
    %v149 = vld [vmem:[%s4 + $0x4] sm:$0xf]
    %v150 = vld [vmem:[%s4 + $0x8] sm:$0xf]
    %v151 = vld [vmem:[%s4 + $0xc] sm:$0xf]
    %v152 = vld [vmem:[%s4 + $0x10] sm:$0xf]
    %v153 = vld [vmem:[%s4 + $0x14] sm:$0xf]
    %v154 = vld [vmem:[%s4 + $0x18] sm:$0xf]
    %v155 = vld [vmem:[%s4 + $0x1c] sm:$0xf]
    %v156 = vld [vmem:[%s5] sm:$0xff]
    %v157 = vld [vmem:[%s5 + $0x8] sm:$0xff]
    %v158 = vld [vmem:[%s5 + $0x10] sm:$0xff]
    %v159 = vld [vmem:[%s5 + $0x18] sm:$0xff]
    %v160 = vld [vmem:[%s5 + $0x20] sm:$0xff]
    %v161 = vld [vmem:[%s5 + $0x28] sm:$0xff]
    %v162 = vld [vmem:[%s5 + $0x30] sm:$0xff]
    %v163 = vld [vmem:[%s5 + $0x38] sm:$0xff]
    %v196 = vunpack.c.l.b16 %v116
    %v197 = vunpack.c.h.b16 %v116
    %v198 = vunpack.c.l.b16 %v117
    %v199 = vunpack.c.h.b16 %v117
    %v200 = vunpack.c.l.b16 %v118
    %v201 = vunpack.c.h.b16 %v118
    %v202 = vunpack.c.l.b16 %v119
    %v203 = vunpack.c.h.b16 %v119
    %v204 = vunpack.c.l.b16 %v120
    %v205 = vunpack.c.h.b16 %v120
    %v206 = vunpack.c.l.b16 %v121
    %v207 = vunpack.c.h.b16 %v121
    %v208 = vunpack.c.l.b16 %v122
    %v209 = vunpack.c.h.b16 %v122
    %v210 = vunpack.c.l.b16 %v123
    %v211 = vunpack.c.h.b16 %v123
    %v212 = vunpack.c.l.b16 %v124
    %v213 = vunpack.c.h.b16 %v124
    %v214 = vunpack.c.l.b16 %v125
    %v215 = vunpack.c.h.b16 %v125
    %v216 = vunpack.c.l.b16 %v126
    %v217 = vunpack.c.h.b16 %v126
    %v218 = vunpack.c.l.b16 %v127
    %v219 = vunpack.c.h.b16 %v127
    %v220 = vunpack.c.l.b16 %v128
    %v221 = vunpack.c.h.b16 %v128
    %v222 = vunpack.c.l.b16 %v129
    %v223 = vunpack.c.h.b16 %v129
    %v224 = vunpack.c.l.b16 %v130
    %v225 = vunpack.c.h.b16 %v130
    %v226 = vunpack.c.l.b16 %v131
    %v227 = vunpack.c.h.b16 %v131
    %v228 = vunpack.c.l.b16 %v132
    %v229 = vunpack.c.h.b16 %v132
    %v230 = vunpack.c.l.b16 %v133
    %v231 = vunpack.c.h.b16 %v133
    %v232 = vunpack.c.l.b16 %v134
    %v233 = vunpack.c.h.b16 %v134
    %v234 = vunpack.c.l.b16 %v135
    %v235 = vunpack.c.h.b16 %v135
    %v236 = vunpack.c.l.b16 %v136
    %v237 = vunpack.c.h.b16 %v136
    %v238 = vunpack.c.l.b16 %v137
    %v239 = vunpack.c.h.b16 %v137
    %v240 = vunpack.c.l.b16 %v138
    %v241 = vunpack.c.h.b16 %v138
    %v242 = vunpack.c.l.b16 %v139
    %v243 = vunpack.c.h.b16 %v139
    %v244 = vunpack.c.l.b16 %v140
    %v245 = vunpack.c.h.b16 %v140
    %v246 = vunpack.c.l.b16 %v141
    %v247 = vunpack.c.h.b16 %v141
    %v248 = vunpack.c.l.b16 %v142
    %v249 = vunpack.c.h.b16 %v142
    %v250 = vunpack.c.l.b16 %v143
    %v251 = vunpack.c.h.b16 %v143
    %v252 = vunpack.c.l.b16 %v144
    %v253 = vunpack.c.h.b16 %v144
    %v254 = vunpack.c.l.b16 %v145
    %v255 = vunpack.c.h.b16 %v145
    %v256 = vunpack.c.l.b16 %v146
    %v257 = vunpack.c.h.b16 %v146
    %v258 = vunpack.c.l.b16 %v147
    %v259 = vunpack.c.h.b16 %v147
    %v260 = vpack.c.b16 %v198, %v196
    %v261 = vpack.c.b16 %v199, %v197
    %v262 = vpack.c.b16 %v202, %v200
    %v263 = vpack.c.b16 %v203, %v201
    %v264 = vpack.c.b16 %v206, %v204
    %v265 = vpack.c.b16 %v207, %v205
    %v266 = vpack.c.b16 %v210, %v208
    %v267 = vpack.c.b16 %v211, %v209
    %v268 = vpack.c.b16 %v214, %v212
    %v269 = vpack.c.b16 %v215, %v213
    %v270 = vpack.c.b16 %v218, %v216
    %v271 = vpack.c.b16 %v219, %v217
    %v272 = vpack.c.b16 %v222, %v220
    %v273 = vpack.c.b16 %v223, %v221
    %v274 = vpack.c.b16 %v226, %v224
    %v275 = vpack.c.b16 %v227, %v225
    %v276 = vpack.c.b16 %v230, %v228
    %v277 = vpack.c.b16 %v231, %v229
    %v278 = vpack.c.b16 %v234, %v232
    %v279 = vpack.c.b16 %v235, %v233
    %v280 = vpack.c.b16 %v238, %v236
    %v281 = vpack.c.b16 %v239, %v237
    %v282 = vpack.c.b16 %v242, %v240
    %v283 = vpack.c.b16 %v243, %v241
    %v284 = vpack.c.b16 %v246, %v244
    %v285 = vpack.c.b16 %v247, %v245
    %v286 = vpack.c.b16 %v250, %v248
    %v287 = vpack.c.b16 %v251, %v249
    %v288 = vpack.c.b16 %v254, %v252
    %v289 = vpack.c.b16 %v255, %v253
    %v290 = vpack.c.b16 %v258, %v256
    %v291 = vpack.c.b16 %v259, %v257
    %324 = vmatprep.subr.bf16.mxu0 %v261
    %325 = vmatpush1.bf16.msra.mxu0 %v260
    %326 = vmatprep.subr.bf16.mxu0 %v263
    %327 = vmatpush1.bf16.msra.mxu0 %v262
    %328 = vmatprep.subr.bf16.mxu0 %v265
    %329 = vmatpush1.bf16.msra.mxu0 %v264
    %330 = vmatprep.subr.bf16.mxu0 %v267
    %331 = vmatpush1.bf16.msra.mxu0 %v266
    %332 = vmatprep.subr.bf16.mxu0 %v269
    %333 = vmatpush1.bf16.msra.mxu0 %v268
    %334 = vmatprep.subr.bf16.mxu0 %v271
    %335 = vmatpush1.bf16.msra.mxu0 %v270
    %336 = vmatprep.subr.bf16.mxu0 %v273
    %337 = vmatpush1.bf16.msra.mxu0 %v272
    %338 = vmatprep.subr.bf16.mxu0 %v275
    %339 = vmatpush1.bf16.msra.mxu0 %v274
    %340 = vmatprep.subr.bf16.mxu0 %v277
    %341 = vmatpush1.bf16.msra.mxu0 %v276
    %342 = vmatprep.subr.bf16.mxu0 %v279
    %343 = vmatpush1.bf16.msra.mxu0 %v278
    %344 = vmatprep.subr.bf16.mxu0 %v281
    %345 = vmatpush1.bf16.msra.mxu0 %v280
    %346 = vmatprep.subr.bf16.mxu0 %v283
    %347 = vmatpush1.bf16.msra.mxu0 %v282
    %348 = vmatprep.subr.bf16.mxu0 %v285
    %349 = vmatpush1.bf16.msra.mxu0 %v284
    %350 = vmatprep.subr.bf16.mxu0 %v287
    %351 = vmatpush1.bf16.msra.mxu0 %v286
    %352 = vmatprep.subr.bf16.mxu0 %v289
    %353 = vmatpush1.bf16.msra.mxu0 %v288
    %354 = vmatprep.subr.bf16.mxu0 %v291
    %355 = vmatpush1.bf16.msra.mxu0 %v290
    %356 = vmatprep.mubr.bf16.mxu0 %v115
    %357 = vmatmul.mubr.bf16.gmra.mrb[0].mxu0 %v114
    %v358 = vpop.f32.mrb[0].mxu0
    %v359 = vadd.f32 0.0, %v358
    %v360 = vpop.f32.mrb[0].mxu0
    %v361 = vadd.f32 0.0, %v360
    %v362 = vpop.f32.mrb[0].mxu0
    %v363 = vadd.f32 0.0, %v362
    %v364 = vpop.f32.mrb[0].mxu0
    %v365 = vadd.f32 0.0, %v364
    %366 = vdwg.mxu0
    %v367 = vpack.c.bf16 %v363, %v359
    %v368 = vpack.c.bf16 %v365, %v361
    %370 = vset.pattern.permute.xlu0 0
    %371 = vperm.xlu0 %370, %v156
    %v372 = vpop.permute.xlu0 %371
    %375 = vset.pattern.permute.xlu0 0
    %376 = vperm.xlu0 %375, %v157
    %v377 = vpop.permute.xlu0 %376
    %380 = vset.pattern.permute.xlu0 0
    %381 = vperm.xlu0 %380, %v158
    %v382 = vpop.permute.xlu0 %381
    %385 = vset.pattern.permute.xlu0 0
    %386 = vperm.xlu0 %385, %v159
    %v387 = vpop.permute.xlu0 %386
    %390 = vset.pattern.permute.xlu0 0
    %391 = vperm.xlu0 %390, %v160
    %v392 = vpop.permute.xlu0 %391
    %395 = vset.pattern.permute.xlu0 0
    %396 = vperm.xlu0 %395, %v161
    %v397 = vpop.permute.xlu0 %396
    %400 = vset.pattern.permute.xlu0 0
    %401 = vperm.xlu0 %400, %v162
    %v402 = vpop.permute.xlu0 %401
    %405 = vset.pattern.permute.xlu0 0
    %406 = vperm.xlu0 %405, %v163
    %v407 = vpop.permute.xlu0 %406
    %v417 = vunpack.c.l.b16 %v148
    %v418 = vunpack.c.l.b16 %v149
    %v419 = vunpack.c.l.b16 %v150
    %v420 = vunpack.c.l.b16 %v151
    %v421 = vunpack.c.l.b16 %v152
    %v422 = vunpack.c.l.b16 %v153
    %v423 = vunpack.c.l.b16 %v154
    %v424 = vunpack.c.l.b16 %v155
    %v425 = vpack.c.b16 %v418, %v417
    %v426 = vpack.c.b16 %v420, %v419
    %v427 = vpack.c.b16 %v422, %v421
    %v428 = vpack.c.b16 %v424, %v423
    %vm429 = vcmask 130048
    %v431 = vsel %vm429, %v425, 0
    %v434 = vsel %vm429, %v426, 0
    %v437 = vsel %vm429, %v427, 0
    %v440 = vsel %vm429, %v428, 0
    %442 = vmatprep.subr.bf16.mxu0 %v368
    %443 = vmatpush1.bf16.msra.mxu0 %v367
    %444 = vmatprep.subr.bf16.mxu0 0
    %445 = vmatpush1.bf16.msra.mxu0 0
    %446 = vmatprep.subr.bf16.mxu0 0
    %447 = vmatpush1.bf16.msra.mxu0 0
    %448 = vmatprep.subr.bf16.mxu0 0
    %449 = vmatpush1.bf16.msra.mxu0 0
    %450 = vmatprep.subr.bf16.mxu0 0
    %451 = vmatpush1.bf16.msra.mxu0 0
    %452 = vmatprep.subr.bf16.mxu0 0
    %453 = vmatpush1.bf16.msra.mxu0 0
    %454 = vmatprep.subr.bf16.mxu0 0
    %455 = vmatpush1.bf16.msra.mxu0 0
    %456 = vmatprep.subr.bf16.mxu0 0
    %457 = vmatpush1.bf16.msra.mxu0 0
    %458 = vmatprep.subr.bf16.mxu0 0
    %459 = vmatpush1.bf16.msra.mxu0 0
    %460 = vmatprep.subr.bf16.mxu0 0
    %461 = vmatpush1.bf16.msra.mxu0 0
    %462 = vmatprep.subr.bf16.mxu0 0
    %463 = vmatpush1.bf16.msra.mxu0 0
    %464 = vmatprep.subr.bf16.mxu0 0
    %465 = vmatpush1.bf16.msra.mxu0 0
    %466 = vmatprep.subr.bf16.mxu0 0
    %467 = vmatpush1.bf16.msra.mxu0 0
    %468 = vmatprep.subr.bf16.mxu0 0
    %469 = vmatpush1.bf16.msra.mxu0 0
    %470 = vmatprep.subr.bf16.mxu0 0
    %471 = vmatpush1.bf16.msra.mxu0 0
    %472 = vmatprep.subr.bf16.mxu0 0
    %473 = vmatpush1.bf16.msra.mxu0 0
    %474 = vmatprep.mubr.bf16.mxu0 0
    %475 = vmatmul.mubr.bf16.gmra.mrb[0].mxu0 %v431
    %v476 = vpop.f32.mrb[0].mxu0
    %v477 = vadd.f32 %v372, %v476
    %v478 = vpop.f32.mrb[0].mxu0
    %v479 = vadd.f32 %v372, %v478
    %v480 = vpop.f32.mrb[0].mxu0
    %v481 = vadd.f32 %v377, %v480
    %v482 = vpop.f32.mrb[0].mxu0
    %v483 = vadd.f32 %v377, %v482
    %484 = vmatprep.mubr.bf16.mxu0 0
    %485 = vmatmul.mubr.bf16.gmra.mrb[0].mxu0 %v434
    %v486 = vpop.f32.mrb[0].mxu0
    %v487 = vadd.f32 %v382, %v486
    %v488 = vpop.f32.mrb[0].mxu0
    %v489 = vadd.f32 %v382, %v488
    %v490 = vpop.f32.mrb[0].mxu0
    %v491 = vadd.f32 %v387, %v490
    %v492 = vpop.f32.mrb[0].mxu0
    %v493 = vadd.f32 %v387, %v492
    %494 = vmatprep.mubr.bf16.mxu0 0
    %495 = vmatmul.mubr.bf16.gmra.mrb[0].mxu0 %v437
    %v496 = vpop.f32.mrb[0].mxu0
    %v497 = vadd.f32 %v392, %v496
    %v498 = vpop.f32.mrb[0].mxu0
    %v499 = vadd.f32 %v392, %v498
    %v500 = vpop.f32.mrb[0].mxu0
    %v501 = vadd.f32 %v397, %v500
    %v502 = vpop.f32.mrb[0].mxu0
    %v503 = vadd.f32 %v397, %v502
    %504 = vmatprep.mubr.bf16.mxu0 0
    %505 = vmatmul.mubr.bf16.gmra.mrb[0].mxu0 %v440
    %v506 = vpop.f32.mrb[0].mxu0
    %v507 = vadd.f32 %v402, %v506
    %v508 = vpop.f32.mrb[0].mxu0
    %v509 = vadd.f32 %v402, %v508
    %v510 = vpop.f32.mrb[0].mxu0
    %v511 = vadd.f32 %v407, %v510
    %v512 = vpop.f32.mrb[0].mxu0
    %v513 = vadd.f32 %v407, %v512
    %514 = vdwg.mxu0
    %v515 = vmax.f32 %v477, 0.0
    %v516 = vmax.f32 %v479, 0.0
    %v517 = vmax.f32 %v481, 0.0
    %v518 = vmax.f32 %v483, 0.0
    %v519 = vmax.f32 %v487, 0.0
    %v520 = vmax.f32 %v489, 0.0
    %v521 = vmax.f32 %v491, 0.0
    %v522 = vmax.f32 %v493, 0.0
    %v523 = vmax.f32 %v497, 0.0
    %v524 = vmax.f32 %v499, 0.0
    %v525 = vmax.f32 %v501, 0.0
    %v526 = vmax.f32 %v503, 0.0
    %v527 = vmax.f32 %v507, 0.0
    %v528 = vmax.f32 %v509, 0.0
    %v529 = vmax.f32 %v511, 0.0
    %v530 = vmax.f32 %v513, 0.0
    %v531 = vpack.c.bf16 %v517, %v515
    %v532 = vpack.c.bf16 %v518, %v516
    %v533 = vpack.c.bf16 %v521, %v519
    %v534 = vpack.c.bf16 %v522, %v520
    %v535 = vpack.c.bf16 %v525, %v523
    %v536 = vpack.c.bf16 %v526, %v524
    %v537 = vpack.c.bf16 %v529, %v527
    %v538 = vpack.c.bf16 %v530, %v528
    %v539 = vld [vmem:[#allocation7] sm:$0xf]
    %v540 = vld [vmem:[#allocation7 + $0x4] sm:$0xf]
    %v541 = vld [vmem:[#allocation7 + $0x8] sm:$0xf]
    %v542 = vld [vmem:[#allocation7 + $0xc] sm:$0xf]
    %v543 = vld [vmem:[#allocation7 + $0x10] sm:$0xf]
    %v544 = vld [vmem:[#allocation7 + $0x14] sm:$0xf]
    %v545 = vld [vmem:[#allocation7 + $0x18] sm:$0xf]
    %v546 = vld [vmem:[#allocation7 + $0x1c] sm:$0xf]
    %v547 = vld [vmem:[%s7] sm:$0xff]
    %v548 = vld [vmem:[%s7 + $0x8] sm:$0xff]
    %v549 = vld [vmem:[%s7 + $0x10] sm:$0xff]
    %v550 = vld [vmem:[%s7 + $0x18] sm:$0xff]
    %v551 = vld [vmem:[%s7 + $0x20] sm:$0xff]
    %v552 = vld [vmem:[%s7 + $0x28] sm:$0xff]
    %v553 = vld [vmem:[%s7 + $0x30] sm:$0xff]
    %v554 = vld [vmem:[%s7 + $0x38] sm:$0xff]
    %v563 = vunpack.c.l.b16 %v539
    %v564 = vunpack.c.l.b16 %v540
    %v565 = vunpack.c.l.b16 %v541
    %v566 = vunpack.c.l.b16 %v542
    %v567 = vunpack.c.l.b16 %v543
    %v568 = vunpack.c.l.b16 %v544
    %v569 = vunpack.c.l.b16 %v545
    %v570 = vunpack.c.l.b16 %v546
    %v571 = vpack.c.b16 %v564, %v563
    %v572 = vpack.c.b16 %v566, %v565
    %v573 = vpack.c.b16 %v568, %v567
    %v574 = vpack.c.b16 %v570, %v569
    %vm575 = vcmask 523264
    %v577 = vsel %vm575, %v571, 0
    %v580 = vsel %vm575, %v572, 0
    %v583 = vsel %vm575, %v573, 0
    %v586 = vsel %vm575, %v574, 0
    %588 = vmatprep.subr.bf16.mxu0 %v532
    %589 = vmatpush1.bf16.msra.mxu0 %v531
    %590 = vmatprep.subr.bf16.mxu0 %v534
    %591 = vmatpush1.bf16.msra.mxu0 %v533
    %592 = vmatprep.subr.bf16.mxu0 %v536
    %593 = vmatpush1.bf16.msra.mxu0 %v535
    %594 = vmatprep.subr.bf16.mxu0 %v538
    %595 = vmatpush1.bf16.msra.mxu0 %v537
    %596 = vmatprep.subr.bf16.mxu0 0
    %597 = vmatpush1.bf16.msra.mxu0 0
    %598 = vmatprep.subr.bf16.mxu0 0
    %599 = vmatpush1.bf16.msra.mxu0 0
    %600 = vmatprep.subr.bf16.mxu0 0
    %601 = vmatpush1.bf16.msra.mxu0 0
    %602 = vmatprep.subr.bf16.mxu0 0
    %603 = vmatpush1.bf16.msra.mxu0 0
    %604 = vmatprep.subr.bf16.mxu0 0
    %605 = vmatpush1.bf16.msra.mxu0 0
    %606 = vmatprep.subr.bf16.mxu0 0
    %607 = vmatpush1.bf16.msra.mxu0 0
    %608 = vmatprep.subr.bf16.mxu0 0
    %609 = vmatpush1.bf16.msra.mxu0 0
    %610 = vmatprep.subr.bf16.mxu0 0
    %611 = vmatpush1.bf16.msra.mxu0 0
    %612 = vmatprep.subr.bf16.mxu0 0
    %613 = vmatpush1.bf16.msra.mxu0 0
    %614 = vmatprep.subr.bf16.mxu0 0
    %615 = vmatpush1.bf16.msra.mxu0 0
    %616 = vmatprep.subr.bf16.mxu0 0
    %617 = vmatpush1.bf16.msra.mxu0 0
    %618 = vmatprep.subr.bf16.mxu0 0
    %619 = vmatpush1.bf16.msra.mxu0 0
    %620 = vmatprep.mubr.bf16.mxu0 0
    %621 = vmatmul.mubr.bf16.gmra.mrb[0].mxu0 %v577
    %v622 = vpop.f32.mrb[0].mxu0
    %v623 = vadd.f32 0.0, %v622
    %v624 = vpop.f32.mrb[0].mxu0
    %v625 = vadd.f32 0.0, %v624
    %v626 = vpop.f32.mrb[0].mxu0
    %v627 = vadd.f32 0.0, %v626
    %v628 = vpop.f32.mrb[0].mxu0
    %v629 = vadd.f32 0.0, %v628
    %630 = vmatprep.mubr.bf16.mxu0 0
    %631 = vmatmul.mubr.bf16.gmra.mrb[0].mxu0 %v580
    %v632 = vpop.f32.mrb[0].mxu0
    %v633 = vadd.f32 0.0, %v632
    %v634 = vpop.f32.mrb[0].mxu0
    %v635 = vadd.f32 0.0, %v634
    %v636 = vpop.f32.mrb[0].mxu0
    %v637 = vadd.f32 0.0, %v636
    %v638 = vpop.f32.mrb[0].mxu0
    %v639 = vadd.f32 0.0, %v638
    %640 = vmatprep.mubr.bf16.mxu0 0
    %641 = vmatmul.mubr.bf16.gmra.mrb[0].mxu0 %v583
    %v642 = vpop.f32.mrb[0].mxu0
    %v643 = vadd.f32 0.0, %v642
    %v644 = vpop.f32.mrb[0].mxu0
    %v645 = vadd.f32 0.0, %v644
    %v646 = vpop.f32.mrb[0].mxu0
    %v647 = vadd.f32 0.0, %v646
    %v648 = vpop.f32.mrb[0].mxu0
    %v649 = vadd.f32 0.0, %v648
    %650 = vmatprep.mubr.bf16.mxu0 0
    %651 = vmatmul.mubr.bf16.gmra.mrb[0].mxu0 %v586
    %v652 = vpop.f32.mrb[0].mxu0
    %v653 = vadd.f32 0.0, %v652
    %v654 = vpop.f32.mrb[0].mxu0
    %v655 = vadd.f32 0.0, %v654
    %v656 = vpop.f32.mrb[0].mxu0
    %v657 = vadd.f32 0.0, %v656
    %v658 = vpop.f32.mrb[0].mxu0
    %v659 = vadd.f32 0.0, %v658
    %660 = vdwg.mxu0
    %v661 = vpack.c.bf16 %v627, %v623
    %v662 = vpack.c.bf16 %v629, %v625
    %v663 = vpack.c.bf16 %v637, %v633
    %v664 = vpack.c.bf16 %v639, %v635
    %v665 = vpack.c.bf16 %v647, %v643
    %v666 = vpack.c.bf16 %v649, %v645
    %v667 = vpack.c.bf16 %v657, %v653
    %v668 = vpack.c.bf16 %v659, %v655
    %670 = vset.pattern.permute.xlu0 0
    %671 = vperm.xlu0 %670, %v547
    %v672 = vpop.permute.xlu0 %671
    %675 = vset.pattern.permute.xlu0 0
    %676 = vperm.xlu0 %675, %v548
    %v677 = vpop.permute.xlu0 %676
    %680 = vset.pattern.permute.xlu0 0
    %681 = vperm.xlu0 %680, %v549
    %v682 = vpop.permute.xlu0 %681
    %685 = vset.pattern.permute.xlu0 0
    %686 = vperm.xlu0 %685, %v550
    %v687 = vpop.permute.xlu0 %686
    %690 = vset.pattern.permute.xlu0 0
    %691 = vperm.xlu0 %690, %v551
    %v692 = vpop.permute.xlu0 %691
    %695 = vset.pattern.permute.xlu0 0
    %696 = vperm.xlu0 %695, %v552
    %v697 = vpop.permute.xlu0 %696
    %700 = vset.pattern.permute.xlu0 0
    %701 = vperm.xlu0 %700, %v553
    %v702 = vpop.permute.xlu0 %701
    %705 = vset.pattern.permute.xlu0 0
    %706 = vperm.xlu0 %705, %v554
    %v707 = vpop.permute.xlu0 %706
    %709 = vmatprep.subr.bf16.mxu0 %v261
    %710 = vmatpush1.bf16.msra.mxu0 %v260
    %711 = vmatprep.subr.bf16.mxu0 %v263
    %712 = vmatpush1.bf16.msra.mxu0 %v262
    %713 = vmatprep.subr.bf16.mxu0 %v265
    %714 = vmatpush1.bf16.msra.mxu0 %v264
    %715 = vmatprep.subr.bf16.mxu0 %v267
    %716 = vmatpush1.bf16.msra.mxu0 %v266
    %717 = vmatprep.subr.bf16.mxu0 %v269
    %718 = vmatpush1.bf16.msra.mxu0 %v268
    %719 = vmatprep.subr.bf16.mxu0 %v271
    %720 = vmatpush1.bf16.msra.mxu0 %v270
    %721 = vmatprep.subr.bf16.mxu0 %v273
    %722 = vmatpush1.bf16.msra.mxu0 %v272
    %723 = vmatprep.subr.bf16.mxu0 %v275
    %724 = vmatpush1.bf16.msra.mxu0 %v274
    %725 = vmatprep.subr.bf16.mxu0 %v277
    %726 = vmatpush1.bf16.msra.mxu0 %v276
    %727 = vmatprep.subr.bf16.mxu0 %v279
    %728 = vmatpush1.bf16.msra.mxu0 %v278
    %729 = vmatprep.subr.bf16.mxu0 %v281
    %730 = vmatpush1.bf16.msra.mxu0 %v280
    %731 = vmatprep.subr.bf16.mxu0 %v283
    %732 = vmatpush1.bf16.msra.mxu0 %v282
    %733 = vmatprep.subr.bf16.mxu0 %v285
    %734 = vmatpush1.bf16.msra.mxu0 %v284
    %735 = vmatprep.subr.bf16.mxu0 %v287
    %736 = vmatpush1.bf16.msra.mxu0 %v286
    %737 = vmatprep.subr.bf16.mxu0 %v289
    %738 = vmatpush1.bf16.msra.mxu0 %v288
    %739 = vmatprep.subr.bf16.mxu0 %v291
    %740 = vmatpush1.bf16.msra.mxu0 %v290
    %741 = vmatprep.mubr.bf16.mxu0 %v662
    %742 = vmatmul.mubr.bf16.gmra.mrb[0].mxu0 %v661
    %v743 = vpop.f32.mrb[0].mxu0
    %v744 = vadd.f32 %v672, %v743
    %v745 = vpop.f32.mrb[0].mxu0
    %v746 = vadd.f32 %v672, %v745
    %v747 = vpop.f32.mrb[0].mxu0
    %v748 = vadd.f32 %v677, %v747
    %v749 = vpop.f32.mrb[0].mxu0
    %v750 = vadd.f32 %v677, %v749
    %751 = vmatprep.mubr.bf16.mxu0 %v664
    %752 = vmatmul.mubr.bf16.gmra.mrb[0].mxu0 %v663
    %v753 = vpop.f32.mrb[0].mxu0
    %v754 = vadd.f32 %v682, %v753
    %v755 = vpop.f32.mrb[0].mxu0
    %v756 = vadd.f32 %v682, %v755
    %v757 = vpop.f32.mrb[0].mxu0
    %v758 = vadd.f32 %v687, %v757
    %v759 = vpop.f32.mrb[0].mxu0
    %v760 = vadd.f32 %v687, %v759
    %761 = vmatprep.mubr.bf16.mxu0 %v666
    %762 = vmatmul.mubr.bf16.gmra.mrb[0].mxu0 %v665
    %v763 = vpop.f32.mrb[0].mxu0
    %v764 = vadd.f32 %v692, %v763
    %v765 = vpop.f32.mrb[0].mxu0
    %v766 = vadd.f32 %v692, %v765
    %v767 = vpop.f32.mrb[0].mxu0
    %v768 = vadd.f32 %v697, %v767
    %v769 = vpop.f32.mrb[0].mxu0
    %v770 = vadd.f32 %v697, %v769
    %771 = vmatprep.mubr.bf16.mxu0 %v668
    %772 = vmatmul.mubr.bf16.gmra.mrb[0].mxu0 %v667
    %v773 = vpop.f32.mrb[0].mxu0
    %v774 = vadd.f32 %v702, %v773
    %v775 = vpop.f32.mrb[0].mxu0
    %v776 = vadd.f32 %v702, %v775
    %v777 = vpop.f32.mrb[0].mxu0
    %v778 = vadd.f32 %v707, %v777
    %v779 = vpop.f32.mrb[0].mxu0
    %v780 = vadd.f32 %v707, %v779
    %781 = vdwg.mxu0
    %v782 = vmax.f32 %v744, 0.0
    %v783 = vmax.f32 %v746, 0.0
    %v784 = vmax.f32 %v748, 0.0
    %v785 = vmax.f32 %v750, 0.0
    %v786 = vmax.f32 %v754, 0.0
    %v787 = vmax.f32 %v756, 0.0
    %v788 = vmax.f32 %v758, 0.0
    %v789 = vmax.f32 %v760, 0.0
    %v790 = vmax.f32 %v764, 0.0
    %v791 = vmax.f32 %v766, 0.0
    %v792 = vmax.f32 %v768, 0.0
    %v793 = vmax.f32 %v770, 0.0
    %v794 = vmax.f32 %v774, 0.0
    %v795 = vmax.f32 %v776, 0.0
    %v796 = vmax.f32 %v778, 0.0
    %v797 = vmax.f32 %v780, 0.0
    %v798 = vld [vmem:[%s2] sm:$0xff]
    %v799 = vld [vmem:[%s2 + $0x8] sm:$0xff]
    %v800 = vld [vmem:[%s2 + $0x10] sm:$0xff]
    %v801 = vld [vmem:[%s2 + $0x18] sm:$0xff]
    %v802 = vld [vmem:[%s2 + $0x20] sm:$0xff]
    %v803 = vld [vmem:[%s2 + $0x28] sm:$0xff]
    %v804 = vld [vmem:[%s2 + $0x30] sm:$0xff]
    %v805 = vld [vmem:[%s2 + $0x38] sm:$0xff]
    %v806 = vld [vmem:[%s2 + $0x40] sm:$0xff]
    %v807 = vld [vmem:[%s2 + $0x48] sm:$0xff]
    %v808 = vld [vmem:[%s2 + $0x50] sm:$0xff]
    %v809 = vld [vmem:[%s2 + $0x58] sm:$0xff]
    %v810 = vld [vmem:[%s2 + $0x60] sm:$0xff]
    %v811 = vld [vmem:[%s2 + $0x68] sm:$0xff]
    %v812 = vld [vmem:[%s2 + $0x70] sm:$0xff]
    %v813 = vld [vmem:[%s2 + $0x78] sm:$0xff]
    %v814 = vld [vmem:[%s2 + $0x80] sm:$0xff]
    %v815 = vld [vmem:[%s2 + $0x88] sm:$0xff]
    %v816 = vld [vmem:[%s2 + $0x90] sm:$0xff]
    %v817 = vld [vmem:[%s2 + $0x98] sm:$0xff]
    %v818 = vld [vmem:[%s2 + $0xa0] sm:$0xff]
    %v819 = vld [vmem:[%s2 + $0xa8] sm:$0xff]
    %v820 = vld [vmem:[%s2 + $0xb0] sm:$0xff]
    %v821 = vld [vmem:[%s2 + $0xb8] sm:$0xff]
    %v822 = vld [vmem:[%s2 + $0xc0] sm:$0xff]
    %v823 = vld [vmem:[%s2 + $0xc8] sm:$0xff]
    %v824 = vld [vmem:[%s2 + $0xd0] sm:$0xff]
    %v825 = vld [vmem:[%s2 + $0xd8] sm:$0xff]
    %v826 = vld [vmem:[%s2 + $0xe0] sm:$0xff]
    %v827 = vld [vmem:[%s2 + $0xe8] sm:$0xff]
    %v828 = vld [vmem:[%s2 + $0xf0] sm:$0xff]
    %v829 = vld [vmem:[%s2 + $0xf8] sm:$0xff]
    %v830 = vld [vmem:[%s8] sm:$0xf]
    %v831 = vld [vmem:[%s8 + $0x4] sm:$0xf]
    %v832 = vld [vmem:[%s8 + $0x8] sm:$0xf]
    %v833 = vld [vmem:[%s8 + $0xc] sm:$0xf]
    %v834 = vld [vmem:[%s8 + $0x10] sm:$0xf]
    %v835 = vld [vmem:[%s8 + $0x14] sm:$0xf]
    %v836 = vld [vmem:[%s8 + $0x18] sm:$0xf]
    %v837 = vld [vmem:[%s8 + $0x1c] sm:$0xf]
    %v838 = vld [vmem:[%s9] sm:$0xff]
    %v839 = vld [vmem:[%s9 + $0x8] sm:$0xff]
    %v840 = vld [vmem:[%s9 + $0x10] sm:$0xff]
    %v841 = vld [vmem:[%s9 + $0x18] sm:$0xff]
    %v842 = vld [vmem:[%s9 + $0x20] sm:$0xff]
    %v843 = vld [vmem:[%s9 + $0x28] sm:$0xff]
    %v844 = vld [vmem:[%s9 + $0x30] sm:$0xff]
    %v845 = vld [vmem:[%s9 + $0x38] sm:$0xff]
    %v878 = vunpack.c.l.b16 %v798
    %v879 = vunpack.c.h.b16 %v798
    %v880 = vunpack.c.l.b16 %v799
    %v881 = vunpack.c.h.b16 %v799
    %v882 = vunpack.c.l.b16 %v800
    %v883 = vunpack.c.h.b16 %v800
    %v884 = vunpack.c.l.b16 %v801
    %v885 = vunpack.c.h.b16 %v801
    %v886 = vunpack.c.l.b16 %v802
    %v887 = vunpack.c.h.b16 %v802
    %v888 = vunpack.c.l.b16 %v803
    %v889 = vunpack.c.h.b16 %v803
    %v890 = vunpack.c.l.b16 %v804
    %v891 = vunpack.c.h.b16 %v804
    %v892 = vunpack.c.l.b16 %v805
    %v893 = vunpack.c.h.b16 %v805
    %v894 = vunpack.c.l.b16 %v806
    %v895 = vunpack.c.h.b16 %v806
    %v896 = vunpack.c.l.b16 %v807
    %v897 = vunpack.c.h.b16 %v807
    %v898 = vunpack.c.l.b16 %v808
    %v899 = vunpack.c.h.b16 %v808
    %v900 = vunpack.c.l.b16 %v809
    %v901 = vunpack.c.h.b16 %v809
    %v902 = vunpack.c.l.b16 %v810
    %v903 = vunpack.c.h.b16 %v810
    %v904 = vunpack.c.l.b16 %v811
    %v905 = vunpack.c.h.b16 %v811
    %v906 = vunpack.c.l.b16 %v812
    %v907 = vunpack.c.h.b16 %v812
    %v908 = vunpack.c.l.b16 %v813
    %v909 = vunpack.c.h.b16 %v813
    %v910 = vunpack.c.l.b16 %v814
    %v911 = vunpack.c.h.b16 %v814
    %v912 = vunpack.c.l.b16 %v815
    %v913 = vunpack.c.h.b16 %v815
    %v914 = vunpack.c.l.b16 %v816
    %v915 = vunpack.c.h.b16 %v816
    %v916 = vunpack.c.l.b16 %v817
    %v917 = vunpack.c.h.b16 %v817
    %v918 = vunpack.c.l.b16 %v818
    %v919 = vunpack.c.h.b16 %v818
    %v920 = vunpack.c.l.b16 %v819
    %v921 = vunpack.c.h.b16 %v819
    %v922 = vunpack.c.l.b16 %v820
    %v923 = vunpack.c.h.b16 %v820
    %v924 = vunpack.c.l.b16 %v821
    %v925 = vunpack.c.h.b16 %v821
    %v926 = vunpack.c.l.b16 %v822
    %v927 = vunpack.c.h.b16 %v822
    %v928 = vunpack.c.l.b16 %v823
    %v929 = vunpack.c.h.b16 %v823
    %v930 = vunpack.c.l.b16 %v824
    %v931 = vunpack.c.h.b16 %v824
    %v932 = vunpack.c.l.b16 %v825
    %v933 = vunpack.c.h.b16 %v825
    %v934 = vunpack.c.l.b16 %v826
    %v935 = vunpack.c.h.b16 %v826
    %v936 = vunpack.c.l.b16 %v827
    %v937 = vunpack.c.h.b16 %v827
    %v938 = vunpack.c.l.b16 %v828
    %v939 = vunpack.c.h.b16 %v828
    %v940 = vunpack.c.l.b16 %v829
    %v941 = vunpack.c.h.b16 %v829
    %v942 = vpack.c.b16 %v880, %v878
    %v943 = vpack.c.b16 %v881, %v879
    %v944 = vpack.c.b16 %v884, %v882
    %v945 = vpack.c.b16 %v885, %v883
    %v946 = vpack.c.b16 %v888, %v886
    %v947 = vpack.c.b16 %v889, %v887
    %v948 = vpack.c.b16 %v892, %v890
    %v949 = vpack.c.b16 %v893, %v891
    %v950 = vpack.c.b16 %v896, %v894
    %v951 = vpack.c.b16 %v897, %v895
    %v952 = vpack.c.b16 %v900, %v898
    %v953 = vpack.c.b16 %v901, %v899
    %v954 = vpack.c.b16 %v904, %v902
    %v955 = vpack.c.b16 %v905, %v903
    %v956 = vpack.c.b16 %v908, %v906
    %v957 = vpack.c.b16 %v909, %v907
    %v958 = vpack.c.b16 %v912, %v910
    %v959 = vpack.c.b16 %v913, %v911
    %v960 = vpack.c.b16 %v916, %v914
    %v961 = vpack.c.b16 %v917, %v915
    %v962 = vpack.c.b16 %v920, %v918
    %v963 = vpack.c.b16 %v921, %v919
    %v964 = vpack.c.b16 %v924, %v922
    %v965 = vpack.c.b16 %v925, %v923
    %v966 = vpack.c.b16 %v928, %v926
    %v967 = vpack.c.b16 %v929, %v927
    %v968 = vpack.c.b16 %v932, %v930
    %v969 = vpack.c.b16 %v933, %v931
    %v970 = vpack.c.b16 %v936, %v934
    %v971 = vpack.c.b16 %v937, %v935
    %v972 = vpack.c.b16 %v940, %v938
    %v973 = vpack.c.b16 %v941, %v939
    %1006 = vmatprep.subr.bf16.mxu0 %v943
    %1007 = vmatpush1.bf16.msra.mxu0 %v942
    %1008 = vmatprep.subr.bf16.mxu0 %v945
    %1009 = vmatpush1.bf16.msra.mxu0 %v944
    %1010 = vmatprep.subr.bf16.mxu0 %v947
    %1011 = vmatpush1.bf16.msra.mxu0 %v946
    %1012 = vmatprep.subr.bf16.mxu0 %v949
    %1013 = vmatpush1.bf16.msra.mxu0 %v948
    %1014 = vmatprep.subr.bf16.mxu0 %v951
    %1015 = vmatpush1.bf16.msra.mxu0 %v950
    %1016 = vmatprep.subr.bf16.mxu0 %v953
    %1017 = vmatpush1.bf16.msra.mxu0 %v952
    %1018 = vmatprep.subr.bf16.mxu0 %v955
    %1019 = vmatpush1.bf16.msra.mxu0 %v954
    %1020 = vmatprep.subr.bf16.mxu0 %v957
    %1021 = vmatpush1.bf16.msra.mxu0 %v956
    %1022 = vmatprep.subr.bf16.mxu0 %v959
    %1023 = vmatpush1.bf16.msra.mxu0 %v958
    %1024 = vmatprep.subr.bf16.mxu0 %v961
    %1025 = vmatpush1.bf16.msra.mxu0 %v960
    %1026 = vmatprep.subr.bf16.mxu0 %v963
    %1027 = vmatpush1.bf16.msra.mxu0 %v962
    %1028 = vmatprep.subr.bf16.mxu0 %v965
    %1029 = vmatpush1.bf16.msra.mxu0 %v964
    %1030 = vmatprep.subr.bf16.mxu0 %v967
    %1031 = vmatpush1.bf16.msra.mxu0 %v966
    %1032 = vmatprep.subr.bf16.mxu0 %v969
    %1033 = vmatpush1.bf16.msra.mxu0 %v968
    %1034 = vmatprep.subr.bf16.mxu0 %v971
    %1035 = vmatpush1.bf16.msra.mxu0 %v970
    %1036 = vmatprep.subr.bf16.mxu0 %v973
    %1037 = vmatpush1.bf16.msra.mxu0 %v972
    %1038 = vmatprep.mubr.bf16.mxu0 %v115
    %1039 = vmatmul.mubr.bf16.gmra.mrb[0].mxu0 %v114
    %v1040 = vpop.f32.mrb[0].mxu0
    %v1041 = vadd.f32 0.0, %v1040
    %v1042 = vpop.f32.mrb[0].mxu0
    %v1043 = vadd.f32 0.0, %v1042
    %v1044 = vpop.f32.mrb[0].mxu0
    %v1045 = vadd.f32 0.0, %v1044
    %v1046 = vpop.f32.mrb[0].mxu0
    %v1047 = vadd.f32 0.0, %v1046
    %1048 = vdwg.mxu0
    %v1049 = vpack.c.bf16 %v1045, %v1041
    %v1050 = vpack.c.bf16 %v1047, %v1043
    %1052 = vset.pattern.permute.xlu0 0
    %1053 = vperm.xlu0 %1052, %v838
    %v1054 = vpop.permute.xlu0 %1053
    %1057 = vset.pattern.permute.xlu0 0
    %1058 = vperm.xlu0 %1057, %v839
    %v1059 = vpop.permute.xlu0 %1058
    %1062 = vset.pattern.permute.xlu0 0
    %1063 = vperm.xlu0 %1062, %v840
    %v1064 = vpop.permute.xlu0 %1063
    %1067 = vset.pattern.permute.xlu0 0
    %1068 = vperm.xlu0 %1067, %v841
    %v1069 = vpop.permute.xlu0 %1068
    %1072 = vset.pattern.permute.xlu0 0
    %1073 = vperm.xlu0 %1072, %v842
    %v1074 = vpop.permute.xlu0 %1073
    %1077 = vset.pattern.permute.xlu0 0
    %1078 = vperm.xlu0 %1077, %v843
    %v1079 = vpop.permute.xlu0 %1078
    %1082 = vset.pattern.permute.xlu0 0
    %1083 = vperm.xlu0 %1082, %v844
    %v1084 = vpop.permute.xlu0 %1083
    %1087 = vset.pattern.permute.xlu0 0
    %1088 = vperm.xlu0 %1087, %v845
    %v1089 = vpop.permute.xlu0 %1088
    %v1099 = vunpack.c.l.b16 %v830
    %v1100 = vunpack.c.l.b16 %v831
    %v1101 = vunpack.c.l.b16 %v832
    %v1102 = vunpack.c.l.b16 %v833
    %v1103 = vunpack.c.l.b16 %v834
    %v1104 = vunpack.c.l.b16 %v835
    %v1105 = vunpack.c.l.b16 %v836
    %v1106 = vunpack.c.l.b16 %v837
    %v1107 = vpack.c.b16 %v1100, %v1099
    %v1108 = vpack.c.b16 %v1102, %v1101
    %v1109 = vpack.c.b16 %v1104, %v1103
    %v1110 = vpack.c.b16 %v1106, %v1105
    %v1112 = vsel %vm429, %v1107, 0
    %v1115 = vsel %vm429, %v1108, 0
    %v1118 = vsel %vm429, %v1109, 0
    %v1121 = vsel %vm429, %v1110, 0
    %1123 = vmatprep.subr.bf16.mxu0 %v1050
    %1124 = vmatpush1.bf16.msra.mxu0 %v1049
    %1125 = vmatprep.subr.bf16.mxu0 0
    %1126 = vmatpush1.bf16.msra.mxu0 0
    %1127 = vmatprep.subr.bf16.mxu0 0
    %1128 = vmatpush1.bf16.msra.mxu0 0
    %1129 = vmatprep.subr.bf16.mxu0 0
    %1130 = vmatpush1.bf16.msra.mxu0 0
    %1131 = vmatprep.subr.bf16.mxu0 0
    %1132 = vmatpush1.bf16.msra.mxu0 0
    %1133 = vmatprep.subr.bf16.mxu0 0
    %1134 = vmatpush1.bf16.msra.mxu0 0
    %1135 = vmatprep.subr.bf16.mxu0 0
    %1136 = vmatpush1.bf16.msra.mxu0 0
    %1137 = vmatprep.subr.bf16.mxu0 0
    %1138 = vmatpush1.bf16.msra.mxu0 0
    %1139 = vmatprep.subr.bf16.mxu0 0
    %1140 = vmatpush1.bf16.msra.mxu0 0
    %1141 = vmatprep.subr.bf16.mxu0 0
    %1142 = vmatpush1.bf16.msra.mxu0 0
    %1143 = vmatprep.subr.bf16.mxu0 0
    %1144 = vmatpush1.bf16.msra.mxu0 0
    %1145 = vmatprep.subr.bf16.mxu0 0
    %1146 = vmatpush1.bf16.msra.mxu0 0
    %1147 = vmatprep.subr.bf16.mxu0 0
    %1148 = vmatpush1.bf16.msra.mxu0 0
    %1149 = vmatprep.subr.bf16.mxu0 0
    %1150 = vmatpush1.bf16.msra.mxu0 0
    %1151 = vmatprep.subr.bf16.mxu0 0
    %1152 = vmatpush1.bf16.msra.mxu0 0
    %1153 = vmatprep.subr.bf16.mxu0 0
    %1154 = vmatpush1.bf16.msra.mxu0 0
    %1155 = vmatprep.mubr.bf16.mxu0 0
    %1156 = vmatmul.mubr.bf16.gmra.mrb[0].mxu0 %v1112
    %v1157 = vpop.f32.mrb[0].mxu0
    %v1158 = vadd.f32 %v1054, %v1157
    %v1159 = vpop.f32.mrb[0].mxu0
    %v1160 = vadd.f32 %v1054, %v1159
    %v1161 = vpop.f32.mrb[0].mxu0
    %v1162 = vadd.f32 %v1059, %v1161
    %v1163 = vpop.f32.mrb[0].mxu0
    %v1164 = vadd.f32 %v1059, %v1163
    %1165 = vmatprep.mubr.bf16.mxu0 0
    %1166 = vmatmul.mubr.bf16.gmra.mrb[0].mxu0 %v1115
    %v1167 = vpop.f32.mrb[0].mxu0
    %v1168 = vadd.f32 %v1064, %v1167
    %v1169 = vpop.f32.mrb[0].mxu0
    %v1170 = vadd.f32 %v1064, %v1169
    %v1171 = vpop.f32.mrb[0].mxu0
    %v1172 = vadd.f32 %v1069, %v1171
    %v1173 = vpop.f32.mrb[0].mxu0
    %v1174 = vadd.f32 %v1069, %v1173
    %1175 = vmatprep.mubr.bf16.mxu0 0
    %1176 = vmatmul.mubr.bf16.gmra.mrb[0].mxu0 %v1118
    %v1177 = vpop.f32.mrb[0].mxu0
    %v1178 = vadd.f32 %v1074, %v1177
    %v1179 = vpop.f32.mrb[0].mxu0
    %v1180 = vadd.f32 %v1074, %v1179
    %v1181 = vpop.f32.mrb[0].mxu0
    %v1182 = vadd.f32 %v1079, %v1181
    %v1183 = vpop.f32.mrb[0].mxu0
    %v1184 = vadd.f32 %v1079, %v1183
    %1185 = vmatprep.mubr.bf16.mxu0 0
    %1186 = vmatmul.mubr.bf16.gmra.mrb[0].mxu0 %v1121
    %v1187 = vpop.f32.mrb[0].mxu0
    %v1188 = vadd.f32 %v1084, %v1187
    %v1189 = vpop.f32.mrb[0].mxu0
    %v1190 = vadd.f32 %v1084, %v1189
    %v1191 = vpop.f32.mrb[0].mxu0
    %v1192 = vadd.f32 %v1089, %v1191
    %v1193 = vpop.f32.mrb[0].mxu0
    %v1194 = vadd.f32 %v1089, %v1193
    %1195 = vdwg.mxu0
    %v1196 = vmax.f32 %v1158, 0.0
    %v1197 = vmax.f32 %v1160, 0.0
    %v1198 = vmax.f32 %v1162, 0.0
    %v1199 = vmax.f32 %v1164, 0.0
    %v1200 = vmax.f32 %v1168, 0.0
    %v1201 = vmax.f32 %v1170, 0.0
    %v1202 = vmax.f32 %v1172, 0.0
    %v1203 = vmax.f32 %v1174, 0.0
    %v1204 = vmax.f32 %v1178, 0.0
    %v1205 = vmax.f32 %v1180, 0.0
    %v1206 = vmax.f32 %v1182, 0.0
    %v1207 = vmax.f32 %v1184, 0.0
    %v1208 = vmax.f32 %v1188, 0.0
    %v1209 = vmax.f32 %v1190, 0.0
    %v1210 = vmax.f32 %v1192, 0.0
    %v1211 = vmax.f32 %v1194, 0.0
    %v1212 = vpack.c.bf16 %v1198, %v1196
    %v1213 = vpack.c.bf16 %v1199, %v1197
    %v1214 = vpack.c.bf16 %v1202, %v1200
    %v1215 = vpack.c.bf16 %v1203, %v1201
    %v1216 = vpack.c.bf16 %v1206, %v1204
    %v1217 = vpack.c.bf16 %v1207, %v1205
    %v1218 = vpack.c.bf16 %v1210, %v1208
    %v1219 = vpack.c.bf16 %v1211, %v1209
    %v1220 = vld [vmem:[%s10] sm:$0xf]
    %v1221 = vld [vmem:[%s10 + $0x4] sm:$0xf]
    %v1222 = vld [vmem:[%s10 + $0x8] sm:$0xf]
    %v1223 = vld [vmem:[%s10 + $0xc] sm:$0xf]
    %v1224 = vld [vmem:[%s10 + $0x10] sm:$0xf]
    %v1225 = vld [vmem:[%s10 + $0x14] sm:$0xf]
    %v1226 = vld [vmem:[%s10 + $0x18] sm:$0xf]
    %v1227 = vld [vmem:[%s10 + $0x1c] sm:$0xf]
    %v1228 = vld [vmem:[%s11] sm:$0xff]
    %v1229 = vld [vmem:[%s11 + $0x8] sm:$0xff]
    %v1230 = vld [vmem:[%s11 + $0x10] sm:$0xff]
    %v1231 = vld [vmem:[%s11 + $0x18] sm:$0xff]
    %v1232 = vld [vmem:[%s11 + $0x20] sm:$0xff]
    %v1233 = vld [vmem:[%s11 + $0x28] sm:$0xff]
    %v1234 = vld [vmem:[%s11 + $0x30] sm:$0xff]
    %v1235 = vld [vmem:[%s11 + $0x38] sm:$0xff]
    %v1244 = vunpack.c.l.b16 %v1220
    %v1245 = vunpack.c.l.b16 %v1221
    %v1246 = vunpack.c.l.b16 %v1222
    %v1247 = vunpack.c.l.b16 %v1223
    %v1248 = vunpack.c.l.b16 %v1224
    %v1249 = vunpack.c.l.b16 %v1225
    %v1250 = vunpack.c.l.b16 %v1226
    %v1251 = vunpack.c.l.b16 %v1227
    %v1252 = vpack.c.b16 %v1245, %v1244
    %v1253 = vpack.c.b16 %v1247, %v1246
    %v1254 = vpack.c.b16 %v1249, %v1248
    %v1255 = vpack.c.b16 %v1251, %v1250
    %v1257 = vsel %vm575, %v1252, 0
    %v1260 = vsel %vm575, %v1253, 0
    %v1263 = vsel %vm575, %v1254, 0
    %v1266 = vsel %vm575, %v1255, 0
    %1268 = vmatprep.subr.bf16.mxu0 %v1213
    %1269 = vmatpush1.bf16.msra.mxu0 %v1212
    %1270 = vmatprep.subr.bf16.mxu0 %v1215
    %1271 = vmatpush1.bf16.msra.mxu0 %v1214
    %1272 = vmatprep.subr.bf16.mxu0 %v1217
    %1273 = vmatpush1.bf16.msra.mxu0 %v1216
    %1274 = vmatprep.subr.bf16.mxu0 %v1219
    %1275 = vmatpush1.bf16.msra.mxu0 %v1218
    %1276 = vmatprep.subr.bf16.mxu0 0
    %1277 = vmatpush1.bf16.msra.mxu0 0
    %1278 = vmatprep.subr.bf16.mxu0 0
    %1279 = vmatpush1.bf16.msra.mxu0 0
    %1280 = vmatprep.subr.bf16.mxu0 0
    %1281 = vmatpush1.bf16.msra.mxu0 0
    %1282 = vmatprep.subr.bf16.mxu0 0
    %1283 = vmatpush1.bf16.msra.mxu0 0
    %1284 = vmatprep.subr.bf16.mxu0 0
    %1285 = vmatpush1.bf16.msra.mxu0 0
    %1286 = vmatprep.subr.bf16.mxu0 0
    %1287 = vmatpush1.bf16.msra.mxu0 0
    %1288 = vmatprep.subr.bf16.mxu0 0
    %1289 = vmatpush1.bf16.msra.mxu0 0
    %1290 = vmatprep.subr.bf16.mxu0 0
    %1291 = vmatpush1.bf16.msra.mxu0 0
    %1292 = vmatprep.subr.bf16.mxu0 0
    %1293 = vmatpush1.bf16.msra.mxu0 0
    %1294 = vmatprep.subr.bf16.mxu0 0
    %1295 = vmatpush1.bf16.msra.mxu0 0
    %1296 = vmatprep.subr.bf16.mxu0 0
    %1297 = vmatpush1.bf16.msra.mxu0 0
    %1298 = vmatprep.subr.bf16.mxu0 0
    %1299 = vmatpush1.bf16.msra.mxu0 0
    %1300 = vmatprep.mubr.bf16.mxu0 0
    %1301 = vmatmul.mubr.bf16.gmra.mrb[0].mxu0 %v1257
    %v1302 = vpop.f32.mrb[0].mxu0
    %v1303 = vadd.f32 0.0, %v1302
    %v1304 = vpop.f32.mrb[0].mxu0
    %v1305 = vadd.f32 0.0, %v1304
    %v1306 = vpop.f32.mrb[0].mxu0
    %v1307 = vadd.f32 0.0, %v1306
    %v1308 = vpop.f32.mrb[0].mxu0
    %v1309 = vadd.f32 0.0, %v1308
    %1310 = vmatprep.mubr.bf16.mxu0 0
    %1311 = vmatmul.mubr.bf16.gmra.mrb[0].mxu0 %v1260
    %v1312 = vpop.f32.mrb[0].mxu0
    %v1313 = vadd.f32 0.0, %v1312
    %v1314 = vpop.f32.mrb[0].mxu0
    %v1315 = vadd.f32 0.0, %v1314
    %v1316 = vpop.f32.mrb[0].mxu0
    %v1317 = vadd.f32 0.0, %v1316
    %v1318 = vpop.f32.mrb[0].mxu0
    %v1319 = vadd.f32 0.0, %v1318
    %1320 = vmatprep.mubr.bf16.mxu0 0
    %1321 = vmatmul.mubr.bf16.gmra.mrb[0].mxu0 %v1263
    %v1322 = vpop.f32.mrb[0].mxu0
    %v1323 = vadd.f32 0.0, %v1322
    %v1324 = vpop.f32.mrb[0].mxu0
    %v1325 = vadd.f32 0.0, %v1324
    %v1326 = vpop.f32.mrb[0].mxu0
    %v1327 = vadd.f32 0.0, %v1326
    %v1328 = vpop.f32.mrb[0].mxu0
    %v1329 = vadd.f32 0.0, %v1328
    %1330 = vmatprep.mubr.bf16.mxu0 0
    %1331 = vmatmul.mubr.bf16.gmra.mrb[0].mxu0 %v1266
    %v1332 = vpop.f32.mrb[0].mxu0
    %v1333 = vadd.f32 0.0, %v1332
    %v1334 = vpop.f32.mrb[0].mxu0
    %v1335 = vadd.f32 0.0, %v1334
    %v1336 = vpop.f32.mrb[0].mxu0
    %v1337 = vadd.f32 0.0, %v1336
    %v1338 = vpop.f32.mrb[0].mxu0
    %v1339 = vadd.f32 0.0, %v1338
    %1340 = vdwg.mxu0
    %v1341 = vpack.c.bf16 %v1307, %v1303
    %v1342 = vpack.c.bf16 %v1309, %v1305
    %v1343 = vpack.c.bf16 %v1317, %v1313
    %v1344 = vpack.c.bf16 %v1319, %v1315
    %v1345 = vpack.c.bf16 %v1327, %v1323
    %v1346 = vpack.c.bf16 %v1329, %v1325
    %v1347 = vpack.c.bf16 %v1337, %v1333
    %v1348 = vpack.c.bf16 %v1339, %v1335
    %1350 = vset.pattern.permute.xlu0 0
    %1351 = vperm.xlu0 %1350, %v1228
    %v1352 = vpop.permute.xlu0 %1351
    %1355 = vset.pattern.permute.xlu0 0
    %1356 = vperm.xlu0 %1355, %v1229
    %v1357 = vpop.permute.xlu0 %1356
    %1360 = vset.pattern.permute.xlu0 0
    %1361 = vperm.xlu0 %1360, %v1230
    %v1362 = vpop.permute.xlu0 %1361
    %1365 = vset.pattern.permute.xlu0 0
    %1366 = vperm.xlu0 %1365, %v1231
    %v1367 = vpop.permute.xlu0 %1366
    %1370 = vset.pattern.permute.xlu0 0
    %1371 = vperm.xlu0 %1370, %v1232
    %v1372 = vpop.permute.xlu0 %1371
    %1375 = vset.pattern.permute.xlu0 0
    %1376 = vperm.xlu0 %1375, %v1233
    %v1377 = vpop.permute.xlu0 %1376
    %1380 = vset.pattern.permute.xlu0 0
    %1381 = vperm.xlu0 %1380, %v1234
    %v1382 = vpop.permute.xlu0 %1381
    %1385 = vset.pattern.permute.xlu0 0
    %1386 = vperm.xlu0 %1385, %v1235
    %v1387 = vpop.permute.xlu0 %1386
    %1389 = vmatprep.subr.bf16.mxu0 %v943
    %1390 = vmatpush1.bf16.msra.mxu0 %v942
    %1391 = vmatprep.subr.bf16.mxu0 %v945
    %1392 = vmatpush1.bf16.msra.mxu0 %v944
    %1393 = vmatprep.subr.bf16.mxu0 %v947
    %1394 = vmatpush1.bf16.msra.mxu0 %v946
    %1395 = vmatprep.subr.bf16.mxu0 %v949
    %1396 = vmatpush1.bf16.msra.mxu0 %v948
    %1397 = vmatprep.subr.bf16.mxu0 %v951
    %1398 = vmatpush1.bf16.msra.mxu0 %v950
    %1399 = vmatprep.subr.bf16.mxu0 %v953
    %1400 = vmatpush1.bf16.msra.mxu0 %v952
    %1401 = vmatprep.subr.bf16.mxu0 %v955
    %1402 = vmatpush1.bf16.msra.mxu0 %v954
    %1403 = vmatprep.subr.bf16.mxu0 %v957
    %1404 = vmatpush1.bf16.msra.mxu0 %v956
    %1405 = vmatprep.subr.bf16.mxu0 %v959
    %1406 = vmatpush1.bf16.msra.mxu0 %v958
    %1407 = vmatprep.subr.bf16.mxu0 %v961
    %1408 = vmatpush1.bf16.msra.mxu0 %v960
    %1409 = vmatprep.subr.bf16.mxu0 %v963
    %1410 = vmatpush1.bf16.msra.mxu0 %v962
    %1411 = vmatprep.subr.bf16.mxu0 %v965
    %1412 = vmatpush1.bf16.msra.mxu0 %v964
    %1413 = vmatprep.subr.bf16.mxu0 %v967
    %1414 = vmatpush1.bf16.msra.mxu0 %v966
    %1415 = vmatprep.subr.bf16.mxu0 %v969
    %1416 = vmatpush1.bf16.msra.mxu0 %v968
    %1417 = vmatprep.subr.bf16.mxu0 %v971
    %1418 = vmatpush1.bf16.msra.mxu0 %v970
    %1419 = vmatprep.subr.bf16.mxu0 %v973
    %1420 = vmatpush1.bf16.msra.mxu0 %v972
    %1421 = vmatprep.mubr.bf16.mxu0 %v1342
    %1422 = vmatmul.mubr.bf16.gmra.mrb[0].mxu0 %v1341
    %v1423 = vpop.f32.mrb[0].mxu0
    %v1424 = vadd.f32 %v1352, %v1423
    %v1425 = vpop.f32.mrb[0].mxu0
    %v1426 = vadd.f32 %v1352, %v1425
    %v1427 = vpop.f32.mrb[0].mxu0
    %v1428 = vadd.f32 %v1357, %v1427
    %v1429 = vpop.f32.mrb[0].mxu0
    %v1430 = vadd.f32 %v1357, %v1429
    %1431 = vmatprep.mubr.bf16.mxu0 %v1344
    %1432 = vmatmul.mubr.bf16.gmra.mrb[0].mxu0 %v1343
    %v1433 = vpop.f32.mrb[0].mxu0
    %v1434 = vadd.f32 %v1362, %v1433
    %v1435 = vpop.f32.mrb[0].mxu0
    %v1436 = vadd.f32 %v1362, %v1435
    %v1437 = vpop.f32.mrb[0].mxu0
    %v1438 = vadd.f32 %v1367, %v1437
    %v1439 = vpop.f32.mrb[0].mxu0
    %v1440 = vadd.f32 %v1367, %v1439
    %1441 = vmatprep.mubr.bf16.mxu0 %v1346
    %1442 = vmatmul.mubr.bf16.gmra.mrb[0].mxu0 %v1345
    %v1443 = vpop.f32.mrb[0].mxu0
    %v1444 = vadd.f32 %v1372, %v1443
    %v1445 = vpop.f32.mrb[0].mxu0
    %v1446 = vadd.f32 %v1372, %v1445
    %v1447 = vpop.f32.mrb[0].mxu0
    %v1448 = vadd.f32 %v1377, %v1447
    %v1449 = vpop.f32.mrb[0].mxu0
    %v1450 = vadd.f32 %v1377, %v1449
    %1451 = vmatprep.mubr.bf16.mxu0 %v1348
    %1452 = vmatmul.mubr.bf16.gmra.mrb[0].mxu0 %v1347
    %v1453 = vpop.f32.mrb[0].mxu0
    %v1454 = vadd.f32 %v1382, %v1453
    %v1455 = vpop.f32.mrb[0].mxu0
    %v1456 = vadd.f32 %v1382, %v1455
    %v1457 = vpop.f32.mrb[0].mxu0
    %v1458 = vadd.f32 %v1387, %v1457
    %v1459 = vpop.f32.mrb[0].mxu0
    %v1460 = vadd.f32 %v1387, %v1459
    %1461 = vdwg.mxu0
    %v1462 = vmax.f32 %v1424, 0.0
    %v1463 = vmax.f32 %v1426, 0.0
    %v1464 = vmax.f32 %v1428, 0.0
    %v1465 = vmax.f32 %v1430, 0.0
    %v1466 = vmax.f32 %v1434, 0.0
    %v1467 = vmax.f32 %v1436, 0.0
    %v1468 = vmax.f32 %v1438, 0.0
    %v1469 = vmax.f32 %v1440, 0.0
    %v1470 = vmax.f32 %v1444, 0.0
    %v1471 = vmax.f32 %v1446, 0.0
    %v1472 = vmax.f32 %v1448, 0.0
    %v1473 = vmax.f32 %v1450, 0.0
    %v1474 = vmax.f32 %v1454, 0.0
    %v1475 = vmax.f32 %v1456, 0.0
    %v1476 = vmax.f32 %v1458, 0.0
    %v1477 = vmax.f32 %v1460, 0.0
    %v1478 = vadd.f32 %v782, %v1462
    %v1479 = vadd.f32 %v783, %v1463
    %v1480 = vadd.f32 %v784, %v1464
    %v1481 = vadd.f32 %v785, %v1465
    %v1482 = vadd.f32 %v786, %v1466
    %v1483 = vadd.f32 %v787, %v1467
    %v1484 = vadd.f32 %v788, %v1468
    %v1485 = vadd.f32 %v789, %v1469
    %v1486 = vadd.f32 %v790, %v1470
    %v1487 = vadd.f32 %v791, %v1471
    %v1488 = vadd.f32 %v792, %v1472
    %v1489 = vadd.f32 %v793, %v1473
    %v1490 = vadd.f32 %v794, %v1474
    %v1491 = vadd.f32 %v795, %v1475
    %v1492 = vadd.f32 %v796, %v1476
    %v1493 = vadd.f32 %v797, %v1477
    %v1494 = vld [vmem:[#allocation5] sm:$0xff]
    %v1495 = vld [vmem:[#allocation5 + $0x8] sm:$0xff]
    %v1496 = vld [vmem:[#allocation5 + $0x10] sm:$0xff]
    %v1497 = vld [vmem:[#allocation5 + $0x18] sm:$0xff]
    %v1498 = vld [vmem:[#allocation5 + $0x20] sm:$0xff]
    %v1499 = vld [vmem:[#allocation5 + $0x28] sm:$0xff]
    %v1500 = vld [vmem:[#allocation5 + $0x30] sm:$0xff]
    %v1501 = vld [vmem:[#allocation5 + $0x38] sm:$0xff]
    %v1502 = vld [vmem:[#allocation5 + $0x40] sm:$0xff]
    %v1503 = vld [vmem:[#allocation5 + $0x48] sm:$0xff]
    %v1504 = vld [vmem:[#allocation5 + $0x50] sm:$0xff]
    %v1505 = vld [vmem:[#allocation5 + $0x58] sm:$0xff]
    %v1506 = vld [vmem:[#allocation5 + $0x60] sm:$0xff]
    %v1507 = vld [vmem:[#allocation5 + $0x68] sm:$0xff]
    %v1508 = vld [vmem:[#allocation5 + $0x70] sm:$0xff]
    %v1509 = vld [vmem:[#allocation5 + $0x78] sm:$0xff]
    %v1510 = vld [vmem:[#allocation5 + $0x80] sm:$0xff]
    %v1511 = vld [vmem:[#allocation5 + $0x88] sm:$0xff]
    %v1512 = vld [vmem:[#allocation5 + $0x90] sm:$0xff]
    %v1513 = vld [vmem:[#allocation5 + $0x98] sm:$0xff]
    %v1514 = vld [vmem:[#allocation5 + $0xa0] sm:$0xff]
    %v1515 = vld [vmem:[#allocation5 + $0xa8] sm:$0xff]
    %v1516 = vld [vmem:[#allocation5 + $0xb0] sm:$0xff]
    %v1517 = vld [vmem:[#allocation5 + $0xb8] sm:$0xff]
    %v1518 = vld [vmem:[#allocation5 + $0xc0] sm:$0xff]
    %v1519 = vld [vmem:[#allocation5 + $0xc8] sm:$0xff]
    %v1520 = vld [vmem:[#allocation5 + $0xd0] sm:$0xff]
    %v1521 = vld [vmem:[#allocation5 + $0xd8] sm:$0xff]
    %v1522 = vld [vmem:[#allocation5 + $0xe0] sm:$0xff]
    %v1523 = vld [vmem:[#allocation5 + $0xe8] sm:$0xff]
    %v1524 = vld [vmem:[#allocation5 + $0xf0] sm:$0xff]
    %v1525 = vld [vmem:[#allocation5 + $0xf8] sm:$0xff]
    %v1526 = vld [vmem:[%s12] sm:$0xf]
    %v1527 = vld [vmem:[%s12 + $0x4] sm:$0xf]
    %v1528 = vld [vmem:[%s12 + $0x8] sm:$0xf]
    %v1529 = vld [vmem:[%s12 + $0xc] sm:$0xf]
    %v1530 = vld [vmem:[%s12 + $0x10] sm:$0xf]
    %v1531 = vld [vmem:[%s12 + $0x14] sm:$0xf]
    %v1532 = vld [vmem:[%s12 + $0x18] sm:$0xf]
    %v1533 = vld [vmem:[%s12 + $0x1c] sm:$0xf]
    %v1534 = vld [vmem:[%s13] sm:$0xff]
    %v1535 = vld [vmem:[%s13 + $0x8] sm:$0xff]
    %v1536 = vld [vmem:[%s13 + $0x10] sm:$0xff]
    %v1537 = vld [vmem:[%s13 + $0x18] sm:$0xff]
    %v1538 = vld [vmem:[%s13 + $0x20] sm:$0xff]
    %v1539 = vld [vmem:[%s13 + $0x28] sm:$0xff]
    %v1540 = vld [vmem:[%s13 + $0x30] sm:$0xff]
    %v1541 = vld [vmem:[%s13 + $0x38] sm:$0xff]
    %v1574 = vunpack.c.l.b16 %v1494
    %v1575 = vunpack.c.h.b16 %v1494
    %v1576 = vunpack.c.l.b16 %v1495
    %v1577 = vunpack.c.h.b16 %v1495
    %v1578 = vunpack.c.l.b16 %v1496
    %v1579 = vunpack.c.h.b16 %v1496
    %v1580 = vunpack.c.l.b16 %v1497
    %v1581 = vunpack.c.h.b16 %v1497
    %v1582 = vunpack.c.l.b16 %v1498
    %v1583 = vunpack.c.h.b16 %v1498
    %v1584 = vunpack.c.l.b16 %v1499
    %v1585 = vunpack.c.h.b16 %v1499
    %v1586 = vunpack.c.l.b16 %v1500
    %v1587 = vunpack.c.h.b16 %v1500
    %v1588 = vunpack.c.l.b16 %v1501
    %v1589 = vunpack.c.h.b16 %v1501
    %v1590 = vunpack.c.l.b16 %v1502
    %v1591 = vunpack.c.h.b16 %v1502
    %v1592 = vunpack.c.l.b16 %v1503
    %v1593 = vunpack.c.h.b16 %v1503
    %v1594 = vunpack.c.l.b16 %v1504
    %v1595 = vunpack.c.h.b16 %v1504
    %v1596 = vunpack.c.l.b16 %v1505
    %v1597 = vunpack.c.h.b16 %v1505
    %v1598 = vunpack.c.l.b16 %v1506
    %v1599 = vunpack.c.h.b16 %v1506
    %v1600 = vunpack.c.l.b16 %v1507
    %v1601 = vunpack.c.h.b16 %v1507
    %v1602 = vunpack.c.l.b16 %v1508
    %v1603 = vunpack.c.h.b16 %v1508
    %v1604 = vunpack.c.l.b16 %v1509
    %v1605 = vunpack.c.h.b16 %v1509
    %v1606 = vunpack.c.l.b16 %v1510
    %v1607 = vunpack.c.h.b16 %v1510
    %v1608 = vunpack.c.l.b16 %v1511
    %v1609 = vunpack.c.h.b16 %v1511
    %v1610 = vunpack.c.l.b16 %v1512
    %v1611 = vunpack.c.h.b16 %v1512
    %v1612 = vunpack.c.l.b16 %v1513
    %v1613 = vunpack.c.h.b16 %v1513
    %v1614 = vunpack.c.l.b16 %v1514
    %v1615 = vunpack.c.h.b16 %v1514
    %v1616 = vunpack.c.l.b16 %v1515
    %v1617 = vunpack.c.h.b16 %v1515
    %v1618 = vunpack.c.l.b16 %v1516
    %v1619 = vunpack.c.h.b16 %v1516
    %v1620 = vunpack.c.l.b16 %v1517
    %v1621 = vunpack.c.h.b16 %v1517
    %v1622 = vunpack.c.l.b16 %v1518
    %v1623 = vunpack.c.h.b16 %v1518
    %v1624 = vunpack.c.l.b16 %v1519
    %v1625 = vunpack.c.h.b16 %v1519
    %v1626 = vunpack.c.l.b16 %v1520
    %v1627 = vunpack.c.h.b16 %v1520
    %v1628 = vunpack.c.l.b16 %v1521
    %v1629 = vunpack.c.h.b16 %v1521
    %v1630 = vunpack.c.l.b16 %v1522
    %v1631 = vunpack.c.h.b16 %v1522
    %v1632 = vunpack.c.l.b16 %v1523
    %v1633 = vunpack.c.h.b16 %v1523
    %v1634 = vunpack.c.l.b16 %v1524
    %v1635 = vunpack.c.h.b16 %v1524
    %v1636 = vunpack.c.l.b16 %v1525
    %v1637 = vunpack.c.h.b16 %v1525
    %v1638 = vpack.c.b16 %v1576, %v1574
    %v1639 = vpack.c.b16 %v1577, %v1575
    %v1640 = vpack.c.b16 %v1580, %v1578
    %v1641 = vpack.c.b16 %v1581, %v1579
    %v1642 = vpack.c.b16 %v1584, %v1582
    %v1643 = vpack.c.b16 %v1585, %v1583
    %v1644 = vpack.c.b16 %v1588, %v1586
    %v1645 = vpack.c.b16 %v1589, %v1587
    %v1646 = vpack.c.b16 %v1592, %v1590
    %v1647 = vpack.c.b16 %v1593, %v1591
    %v1648 = vpack.c.b16 %v1596, %v1594
    %v1649 = vpack.c.b16 %v1597, %v1595
    %v1650 = vpack.c.b16 %v1600, %v1598
    %v1651 = vpack.c.b16 %v1601, %v1599
    %v1652 = vpack.c.b16 %v1604, %v1602
    %v1653 = vpack.c.b16 %v1605, %v1603
    %v1654 = vpack.c.b16 %v1608, %v1606
    %v1655 = vpack.c.b16 %v1609, %v1607
    %v1656 = vpack.c.b16 %v1612, %v1610
    %v1657 = vpack.c.b16 %v1613, %v1611
    %v1658 = vpack.c.b16 %v1616, %v1614
    %v1659 = vpack.c.b16 %v1617, %v1615
    %v1660 = vpack.c.b16 %v1620, %v1618
    %v1661 = vpack.c.b16 %v1621, %v1619
    %v1662 = vpack.c.b16 %v1624, %v1622
    %v1663 = vpack.c.b16 %v1625, %v1623
    %v1664 = vpack.c.b16 %v1628, %v1626
    %v1665 = vpack.c.b16 %v1629, %v1627
    %v1666 = vpack.c.b16 %v1632, %v1630
    %v1667 = vpack.c.b16 %v1633, %v1631
    %v1668 = vpack.c.b16 %v1636, %v1634
    %v1669 = vpack.c.b16 %v1637, %v1635
    %1702 = vmatprep.subr.bf16.mxu0 %v1639
    %1703 = vmatpush1.bf16.msra.mxu0 %v1638
    %1704 = vmatprep.subr.bf16.mxu0 %v1641
    %1705 = vmatpush1.bf16.msra.mxu0 %v1640
    %1706 = vmatprep.subr.bf16.mxu0 %v1643
    %1707 = vmatpush1.bf16.msra.mxu0 %v1642
    %1708 = vmatprep.subr.bf16.mxu0 %v1645
    %1709 = vmatpush1.bf16.msra.mxu0 %v1644
    %1710 = vmatprep.subr.bf16.mxu0 %v1647
    %1711 = vmatpush1.bf16.msra.mxu0 %v1646
    %1712 = vmatprep.subr.bf16.mxu0 %v1649
    %1713 = vmatpush1.bf16.msra.mxu0 %v1648
    %1714 = vmatprep.subr.bf16.mxu0 %v1651
    %1715 = vmatpush1.bf16.msra.mxu0 %v1650
    %1716 = vmatprep.subr.bf16.mxu0 %v1653
    %1717 = vmatpush1.bf16.msra.mxu0 %v1652
    %1718 = vmatprep.subr.bf16.mxu0 %v1655
    %1719 = vmatpush1.bf16.msra.mxu0 %v1654
    %1720 = vmatprep.subr.bf16.mxu0 %v1657
    %1721 = vmatpush1.bf16.msra.mxu0 %v1656
    %1722 = vmatprep.subr.bf16.mxu0 %v1659
    %1723 = vmatpush1.bf16.msra.mxu0 %v1658
    %1724 = vmatprep.subr.bf16.mxu0 %v1661
    %1725 = vmatpush1.bf16.msra.mxu0 %v1660
    %1726 = vmatprep.subr.bf16.mxu0 %v1663
    %1727 = vmatpush1.bf16.msra.mxu0 %v1662
    %1728 = vmatprep.subr.bf16.mxu0 %v1665
    %1729 = vmatpush1.bf16.msra.mxu0 %v1664
    %1730 = vmatprep.subr.bf16.mxu0 %v1667
    %1731 = vmatpush1.bf16.msra.mxu0 %v1666
    %1732 = vmatprep.subr.bf16.mxu0 %v1669
    %1733 = vmatpush1.bf16.msra.mxu0 %v1668
    %1734 = vmatprep.mubr.bf16.mxu0 %v115
    %1735 = vmatmul.mubr.bf16.gmra.mrb[0].mxu0 %v114
    %v1736 = vpop.f32.mrb[0].mxu0
    %v1737 = vadd.f32 0.0, %v1736
    %v1738 = vpop.f32.mrb[0].mxu0
    %v1739 = vadd.f32 0.0, %v1738
    %v1740 = vpop.f32.mrb[0].mxu0
    %v1741 = vadd.f32 0.0, %v1740
    %v1742 = vpop.f32.mrb[0].mxu0
    %v1743 = vadd.f32 0.0, %v1742
    %1744 = vdwg.mxu0
    %v1745 = vpack.c.bf16 %v1741, %v1737
    %v1746 = vpack.c.bf16 %v1743, %v1739
    %1748 = vset.pattern.permute.xlu0 0
    %1749 = vperm.xlu0 %1748, %v1534
    %v1750 = vpop.permute.xlu0 %1749
    %1753 = vset.pattern.permute.xlu0 0
    %1754 = vperm.xlu0 %1753, %v1535
    %v1755 = vpop.permute.xlu0 %1754
    %1758 = vset.pattern.permute.xlu0 0
    %1759 = vperm.xlu0 %1758, %v1536
    %v1760 = vpop.permute.xlu0 %1759
    %1763 = vset.pattern.permute.xlu0 0
    %1764 = vperm.xlu0 %1763, %v1537
    %v1765 = vpop.permute.xlu0 %1764
    %1768 = vset.pattern.permute.xlu0 0
    %1769 = vperm.xlu0 %1768, %v1538
    %v1770 = vpop.permute.xlu0 %1769
    %1773 = vset.pattern.permute.xlu0 0
    %1774 = vperm.xlu0 %1773, %v1539
    %v1775 = vpop.permute.xlu0 %1774
    %1778 = vset.pattern.permute.xlu0 0
    %1779 = vperm.xlu0 %1778, %v1540
    %v1780 = vpop.permute.xlu0 %1779
    %1783 = vset.pattern.permute.xlu0 0
    %1784 = vperm.xlu0 %1783, %v1541
    %v1785 = vpop.permute.xlu0 %1784
    %v1795 = vunpack.c.l.b16 %v1526
    %v1796 = vunpack.c.l.b16 %v1527
    %v1797 = vunpack.c.l.b16 %v1528
    %v1798 = vunpack.c.l.b16 %v1529
    %v1799 = vunpack.c.l.b16 %v1530
    %v1800 = vunpack.c.l.b16 %v1531
    %v1801 = vunpack.c.l.b16 %v1532
    %v1802 = vunpack.c.l.b16 %v1533
    %v1803 = vpack.c.b16 %v1796, %v1795
    %v1804 = vpack.c.b16 %v1798, %v1797
    %v1805 = vpack.c.b16 %v1800, %v1799
    %v1806 = vpack.c.b16 %v1802, %v1801
    %v1808 = vsel %vm429, %v1803, 0
    %v1811 = vsel %vm429, %v1804, 0
    %v1814 = vsel %vm429, %v1805, 0
    %v1817 = vsel %vm429, %v1806, 0
    %1819 = vmatprep.subr.bf16.mxu0 %v1746
    %1820 = vmatpush1.bf16.msra.mxu0 %v1745
    %1821 = vmatprep.subr.bf16.mxu0 0
    %1822 = vmatpush1.bf16.msra.mxu0 0
    %1823 = vmatprep.subr.bf16.mxu0 0
    %1824 = vmatpush1.bf16.msra.mxu0 0
    %1825 = vmatprep.subr.bf16.mxu0 0
    %1826 = vmatpush1.bf16.msra.mxu0 0
    %1827 = vmatprep.subr.bf16.mxu0 0
    %1828 = vmatpush1.bf16.msra.mxu0 0
    %1829 = vmatprep.subr.bf16.mxu0 0
    %1830 = vmatpush1.bf16.msra.mxu0 0
    %1831 = vmatprep.subr.bf16.mxu0 0
    %1832 = vmatpush1.bf16.msra.mxu0 0
    %1833 = vmatprep.subr.bf16.mxu0 0
    %1834 = vmatpush1.bf16.msra.mxu0 0
    %1835 = vmatprep.subr.bf16.mxu0 0
    %1836 = vmatpush1.bf16.msra.mxu0 0
    %1837 = vmatprep.subr.bf16.mxu0 0
    %1838 = vmatpush1.bf16.msra.mxu0 0
    %1839 = vmatprep.subr.bf16.mxu0 0
    %1840 = vmatpush1.bf16.msra.mxu0 0
    %1841 = vmatprep.subr.bf16.mxu0 0
    %1842 = vmatpush1.bf16.msra.mxu0 0
    %1843 = vmatprep.subr.bf16.mxu0 0
    %1844 = vmatpush1.bf16.msra.mxu0 0
    %1845 = vmatprep.subr.bf16.mxu0 0
    %1846 = vmatpush1.bf16.msra.mxu0 0
    %1847 = vmatprep.subr.bf16.mxu0 0
    %1848 = vmatpush1.bf16.msra.mxu0 0
    %1849 = vmatprep.subr.bf16.mxu0 0
    %1850 = vmatpush1.bf16.msra.mxu0 0
    %1851 = vmatprep.mubr.bf16.mxu0 0
    %1852 = vmatmul.mubr.bf16.gmra.mrb[0].mxu0 %v1808
    %v1853 = vpop.f32.mrb[0].mxu0
    %v1854 = vadd.f32 %v1750, %v1853
    %v1855 = vpop.f32.mrb[0].mxu0
    %v1856 = vadd.f32 %v1750, %v1855
    %v1857 = vpop.f32.mrb[0].mxu0
    %v1858 = vadd.f32 %v1755, %v1857
    %v1859 = vpop.f32.mrb[0].mxu0
    %v1860 = vadd.f32 %v1755, %v1859
    %1861 = vmatprep.mubr.bf16.mxu0 0
    %1862 = vmatmul.mubr.bf16.gmra.mrb[0].mxu0 %v1811
    %v1863 = vpop.f32.mrb[0].mxu0
    %v1864 = vadd.f32 %v1760, %v1863
    %v1865 = vpop.f32.mrb[0].mxu0
    %v1866 = vadd.f32 %v1760, %v1865
    %v1867 = vpop.f32.mrb[0].mxu0
    %v1868 = vadd.f32 %v1765, %v1867
    %v1869 = vpop.f32.mrb[0].mxu0
    %v1870 = vadd.f32 %v1765, %v1869
    %1871 = vmatprep.mubr.bf16.mxu0 0
    %1872 = vmatmul.mubr.bf16.gmra.mrb[0].mxu0 %v1814
    %v1873 = vpop.f32.mrb[0].mxu0
    %v1874 = vadd.f32 %v1770, %v1873
    %v1875 = vpop.f32.mrb[0].mxu0
    %v1876 = vadd.f32 %v1770, %v1875
    %v1877 = vpop.f32.mrb[0].mxu0
    %v1878 = vadd.f32 %v1775, %v1877
    %v1879 = vpop.f32.mrb[0].mxu0
    %v1880 = vadd.f32 %v1775, %v1879
    %1881 = vmatprep.mubr.bf16.mxu0 0
    %1882 = vmatmul.mubr.bf16.gmra.mrb[0].mxu0 %v1817
    %v1883 = vpop.f32.mrb[0].mxu0
    %v1884 = vadd.f32 %v1780, %v1883
    %v1885 = vpop.f32.mrb[0].mxu0
    %v1886 = vadd.f32 %v1780, %v1885
    %v1887 = vpop.f32.mrb[0].mxu0
    %v1888 = vadd.f32 %v1785, %v1887
    %v1889 = vpop.f32.mrb[0].mxu0
    %v1890 = vadd.f32 %v1785, %v1889
    %1891 = vdwg.mxu0
    %v1892 = vmax.f32 %v1854, 0.0
    %v1893 = vmax.f32 %v1856, 0.0
    %v1894 = vmax.f32 %v1858, 0.0
    %v1895 = vmax.f32 %v1860, 0.0
    %v1896 = vmax.f32 %v1864, 0.0
    %v1897 = vmax.f32 %v1866, 0.0
    %v1898 = vmax.f32 %v1868, 0.0
    %v1899 = vmax.f32 %v1870, 0.0
    %v1900 = vmax.f32 %v1874, 0.0
    %v1901 = vmax.f32 %v1876, 0.0
    %v1902 = vmax.f32 %v1878, 0.0
    %v1903 = vmax.f32 %v1880, 0.0
    %v1904 = vmax.f32 %v1884, 0.0
    %v1905 = vmax.f32 %v1886, 0.0
    %v1906 = vmax.f32 %v1888, 0.0
    %v1907 = vmax.f32 %v1890, 0.0
    %v1908 = vpack.c.bf16 %v1894, %v1892
    %v1909 = vpack.c.bf16 %v1895, %v1893
    %v1910 = vpack.c.bf16 %v1898, %v1896
    %v1911 = vpack.c.bf16 %v1899, %v1897
    %v1912 = vpack.c.bf16 %v1902, %v1900
    %v1913 = vpack.c.bf16 %v1903, %v1901
    %v1914 = vpack.c.bf16 %v1906, %v1904
    %v1915 = vpack.c.bf16 %v1907, %v1905
    %v1916 = vld [vmem:[#allocation8] sm:$0xf]
    %v1917 = vld [vmem:[#allocation8 + $0x4] sm:$0xf]
    %v1918 = vld [vmem:[#allocation8 + $0x8] sm:$0xf]
    %v1919 = vld [vmem:[#allocation8 + $0xc] sm:$0xf]
    %v1920 = vld [vmem:[#allocation8 + $0x10] sm:$0xf]
    %v1921 = vld [vmem:[#allocation8 + $0x14] sm:$0xf]
    %v1922 = vld [vmem:[#allocation8 + $0x18] sm:$0xf]
    %v1923 = vld [vmem:[#allocation8 + $0x1c] sm:$0xf]
    %v1924 = vld [vmem:[%s15] sm:$0xff]
    %v1925 = vld [vmem:[%s15 + $0x8] sm:$0xff]
    %v1926 = vld [vmem:[%s15 + $0x10] sm:$0xff]
    %v1927 = vld [vmem:[%s15 + $0x18] sm:$0xff]
    %v1928 = vld [vmem:[%s15 + $0x20] sm:$0xff]
    %v1929 = vld [vmem:[%s15 + $0x28] sm:$0xff]
    %v1930 = vld [vmem:[%s15 + $0x30] sm:$0xff]
    %v1931 = vld [vmem:[%s15 + $0x38] sm:$0xff]
    %v1940 = vunpack.c.l.b16 %v1916
    %v1941 = vunpack.c.l.b16 %v1917
    %v1942 = vunpack.c.l.b16 %v1918
    %v1943 = vunpack.c.l.b16 %v1919
    %v1944 = vunpack.c.l.b16 %v1920
    %v1945 = vunpack.c.l.b16 %v1921
    %v1946 = vunpack.c.l.b16 %v1922
    %v1947 = vunpack.c.l.b16 %v1923
    %v1948 = vpack.c.b16 %v1941, %v1940
    %v1949 = vpack.c.b16 %v1943, %v1942
    %v1950 = vpack.c.b16 %v1945, %v1944
    %v1951 = vpack.c.b16 %v1947, %v1946
    %v1953 = vsel %vm575, %v1948, 0
    %v1956 = vsel %vm575, %v1949, 0
    %v1959 = vsel %vm575, %v1950, 0
    %v1962 = vsel %vm575, %v1951, 0
    %1964 = vmatprep.subr.bf16.mxu0 %v1909
    %1965 = vmatpush1.bf16.msra.mxu0 %v1908
    %1966 = vmatprep.subr.bf16.mxu0 %v1911
    %1967 = vmatpush1.bf16.msra.mxu0 %v1910
    %1968 = vmatprep.subr.bf16.mxu0 %v1913
    %1969 = vmatpush1.bf16.msra.mxu0 %v1912
    %1970 = vmatprep.subr.bf16.mxu0 %v1915
    %1971 = vmatpush1.bf16.msra.mxu0 %v1914
    %1972 = vmatprep.subr.bf16.mxu0 0
    %1973 = vmatpush1.bf16.msra.mxu0 0
    %1974 = vmatprep.subr.bf16.mxu0 0
    %1975 = vmatpush1.bf16.msra.mxu0 0
    %1976 = vmatprep.subr.bf16.mxu0 0
    %1977 = vmatpush1.bf16.msra.mxu0 0
    %1978 = vmatprep.subr.bf16.mxu0 0
    %1979 = vmatpush1.bf16.msra.mxu0 0
    %1980 = vmatprep.subr.bf16.mxu0 0
    %1981 = vmatpush1.bf16.msra.mxu0 0
    %1982 = vmatprep.subr.bf16.mxu0 0
    %1983 = vmatpush1.bf16.msra.mxu0 0
    %1984 = vmatprep.subr.bf16.mxu0 0
    %1985 = vmatpush1.bf16.msra.mxu0 0
    %1986 = vmatprep.subr.bf16.mxu0 0
    %1987 = vmatpush1.bf16.msra.mxu0 0
    %1988 = vmatprep.subr.bf16.mxu0 0
    %1989 = vmatpush1.bf16.msra.mxu0 0
    %1990 = vmatprep.subr.bf16.mxu0 0
    %1991 = vmatpush1.bf16.msra.mxu0 0
    %1992 = vmatprep.subr.bf16.mxu0 0
    %1993 = vmatpush1.bf16.msra.mxu0 0
    %1994 = vmatprep.subr.bf16.mxu0 0
    %1995 = vmatpush1.bf16.msra.mxu0 0
    %1996 = vmatprep.mubr.bf16.mxu0 0
    %1997 = vmatmul.mubr.bf16.gmra.mrb[0].mxu0 %v1953
    %v1998 = vpop.f32.mrb[0].mxu0
    %v1999 = vadd.f32 0.0, %v1998
    %v2000 = vpop.f32.mrb[0].mxu0
    %v2001 = vadd.f32 0.0, %v2000
    %v2002 = vpop.f32.mrb[0].mxu0
    %v2003 = vadd.f32 0.0, %v2002
    %v2004 = vpop.f32.mrb[0].mxu0
    %v2005 = vadd.f32 0.0, %v2004
    %2006 = vmatprep.mubr.bf16.mxu0 0
    %2007 = vmatmul.mubr.bf16.gmra.mrb[0].mxu0 %v1956
    %v2008 = vpop.f32.mrb[0].mxu0
    %v2009 = vadd.f32 0.0, %v2008
    %v2010 = vpop.f32.mrb[0].mxu0
    %v2011 = vadd.f32 0.0, %v2010
    %v2012 = vpop.f32.mrb[0].mxu0
    %v2013 = vadd.f32 0.0, %v2012
    %v2014 = vpop.f32.mrb[0].mxu0
    %v2015 = vadd.f32 0.0, %v2014
    %2016 = vmatprep.mubr.bf16.mxu0 0
    %2017 = vmatmul.mubr.bf16.gmra.mrb[0].mxu0 %v1959
    %v2018 = vpop.f32.mrb[0].mxu0
    %v2019 = vadd.f32 0.0, %v2018
    %v2020 = vpop.f32.mrb[0].mxu0
    %v2021 = vadd.f32 0.0, %v2020
    %v2022 = vpop.f32.mrb[0].mxu0
    %v2023 = vadd.f32 0.0, %v2022
    %v2024 = vpop.f32.mrb[0].mxu0
    %v2025 = vadd.f32 0.0, %v2024
    %2026 = vmatprep.mubr.bf16.mxu0 0
    %2027 = vmatmul.mubr.bf16.gmra.mrb[0].mxu0 %v1962
    %v2028 = vpop.f32.mrb[0].mxu0
    %v2029 = vadd.f32 0.0, %v2028
    %v2030 = vpop.f32.mrb[0].mxu0
    %v2031 = vadd.f32 0.0, %v2030
    %v2032 = vpop.f32.mrb[0].mxu0
    %v2033 = vadd.f32 0.0, %v2032
    %v2034 = vpop.f32.mrb[0].mxu0
    %v2035 = vadd.f32 0.0, %v2034
    %2036 = vdwg.mxu0
    %v2037 = vpack.c.bf16 %v2003, %v1999
    %v2038 = vpack.c.bf16 %v2005, %v2001
    %v2039 = vpack.c.bf16 %v2013, %v2009
    %v2040 = vpack.c.bf16 %v2015, %v2011
    %v2041 = vpack.c.bf16 %v2023, %v2019
    %v2042 = vpack.c.bf16 %v2025, %v2021
    %v2043 = vpack.c.bf16 %v2033, %v2029
    %v2044 = vpack.c.bf16 %v2035, %v2031
    %2046 = vset.pattern.permute.xlu0 0
    %2047 = vperm.xlu0 %2046, %v1924
    %v2048 = vpop.permute.xlu0 %2047
    %2051 = vset.pattern.permute.xlu0 0
    %2052 = vperm.xlu0 %2051, %v1925
    %v2053 = vpop.permute.xlu0 %2052
    %2056 = vset.pattern.permute.xlu0 0
    %2057 = vperm.xlu0 %2056, %v1926
    %v2058 = vpop.permute.xlu0 %2057
    %2061 = vset.pattern.permute.xlu0 0
    %2062 = vperm.xlu0 %2061, %v1927
    %v2063 = vpop.permute.xlu0 %2062
    %2066 = vset.pattern.permute.xlu0 0
    %2067 = vperm.xlu0 %2066, %v1928
    %v2068 = vpop.permute.xlu0 %2067
    %2071 = vset.pattern.permute.xlu0 0
    %2072 = vperm.xlu0 %2071, %v1929
    %v2073 = vpop.permute.xlu0 %2072
    %2076 = vset.pattern.permute.xlu0 0
    %2077 = vperm.xlu0 %2076, %v1930
    %v2078 = vpop.permute.xlu0 %2077
    %2081 = vset.pattern.permute.xlu0 0
    %2082 = vperm.xlu0 %2081, %v1931
    %v2083 = vpop.permute.xlu0 %2082
    %2085 = vmatprep.subr.bf16.mxu0 %v1639
    %2086 = vmatpush1.bf16.msra.mxu0 %v1638
    %2087 = vmatprep.subr.bf16.mxu0 %v1641
    %2088 = vmatpush1.bf16.msra.mxu0 %v1640
    %2089 = vmatprep.subr.bf16.mxu0 %v1643
    %2090 = vmatpush1.bf16.msra.mxu0 %v1642
    %2091 = vmatprep.subr.bf16.mxu0 %v1645
    %2092 = vmatpush1.bf16.msra.mxu0 %v1644
    %2093 = vmatprep.subr.bf16.mxu0 %v1647
    %2094 = vmatpush1.bf16.msra.mxu0 %v1646
    %2095 = vmatprep.subr.bf16.mxu0 %v1649
    %2096 = vmatpush1.bf16.msra.mxu0 %v1648
    %2097 = vmatprep.subr.bf16.mxu0 %v1651
    %2098 = vmatpush1.bf16.msra.mxu0 %v1650
    %2099 = vmatprep.subr.bf16.mxu0 %v1653
    %2100 = vmatpush1.bf16.msra.mxu0 %v1652
    %2101 = vmatprep.subr.bf16.mxu0 %v1655
    %2102 = vmatpush1.bf16.msra.mxu0 %v1654
    %2103 = vmatprep.subr.bf16.mxu0 %v1657
    %2104 = vmatpush1.bf16.msra.mxu0 %v1656
    %2105 = vmatprep.subr.bf16.mxu0 %v1659
    %2106 = vmatpush1.bf16.msra.mxu0 %v1658
    %2107 = vmatprep.subr.bf16.mxu0 %v1661
    %2108 = vmatpush1.bf16.msra.mxu0 %v1660
    %2109 = vmatprep.subr.bf16.mxu0 %v1663
    %2110 = vmatpush1.bf16.msra.mxu0 %v1662
    %2111 = vmatprep.subr.bf16.mxu0 %v1665
    %2112 = vmatpush1.bf16.msra.mxu0 %v1664
    %2113 = vmatprep.subr.bf16.mxu0 %v1667
    %2114 = vmatpush1.bf16.msra.mxu0 %v1666
    %2115 = vmatprep.subr.bf16.mxu0 %v1669
    %2116 = vmatpush1.bf16.msra.mxu0 %v1668
    %2117 = vmatprep.mubr.bf16.mxu0 %v2038
    %2118 = vmatmul.mubr.bf16.gmra.mrb[0].mxu0 %v2037
    %v2119 = vpop.f32.mrb[0].mxu0
    %v2120 = vadd.f32 %v2048, %v2119
    %v2121 = vpop.f32.mrb[0].mxu0
    %v2122 = vadd.f32 %v2048, %v2121
    %v2123 = vpop.f32.mrb[0].mxu0
    %v2124 = vadd.f32 %v2053, %v2123
    %v2125 = vpop.f32.mrb[0].mxu0
    %v2126 = vadd.f32 %v2053, %v2125
    %2127 = vmatprep.mubr.bf16.mxu0 %v2040
    %2128 = vmatmul.mubr.bf16.gmra.mrb[0].mxu0 %v2039
    %v2129 = vpop.f32.mrb[0].mxu0
    %v2130 = vadd.f32 %v2058, %v2129
    %v2131 = vpop.f32.mrb[0].mxu0
    %v2132 = vadd.f32 %v2058, %v2131
    %v2133 = vpop.f32.mrb[0].mxu0
    %v2134 = vadd.f32 %v2063, %v2133
    %v2135 = vpop.f32.mrb[0].mxu0
    %v2136 = vadd.f32 %v2063, %v2135
    %2137 = vmatprep.mubr.bf16.mxu0 %v2042
    %2138 = vmatmul.mubr.bf16.gmra.mrb[0].mxu0 %v2041
    %v2139 = vpop.f32.mrb[0].mxu0
    %v2140 = vadd.f32 %v2068, %v2139
    %v2141 = vpop.f32.mrb[0].mxu0
    %v2142 = vadd.f32 %v2068, %v2141
    %v2143 = vpop.f32.mrb[0].mxu0
    %v2144 = vadd.f32 %v2073, %v2143
    %v2145 = vpop.f32.mrb[0].mxu0
    %v2146 = vadd.f32 %v2073, %v2145
    %2147 = vmatprep.mubr.bf16.mxu0 %v2044
    %2148 = vmatmul.mubr.bf16.gmra.mrb[0].mxu0 %v2043
    %v2149 = vpop.f32.mrb[0].mxu0
    %v2150 = vadd.f32 %v2078, %v2149
    %v2151 = vpop.f32.mrb[0].mxu0
    %v2152 = vadd.f32 %v2078, %v2151
    %v2153 = vpop.f32.mrb[0].mxu0
    %v2154 = vadd.f32 %v2083, %v2153
    %v2155 = vpop.f32.mrb[0].mxu0
    %v2156 = vadd.f32 %v2083, %v2155
    %2157 = vdwg.mxu0
    %v2158 = vmax.f32 %v2120, 0.0
    %v2159 = vmax.f32 %v2122, 0.0
    %v2160 = vmax.f32 %v2124, 0.0
    %v2161 = vmax.f32 %v2126, 0.0
    %v2162 = vmax.f32 %v2130, 0.0
    %v2163 = vmax.f32 %v2132, 0.0
    %v2164 = vmax.f32 %v2134, 0.0
    %v2165 = vmax.f32 %v2136, 0.0
    %v2166 = vmax.f32 %v2140, 0.0
    %v2167 = vmax.f32 %v2142, 0.0
    %v2168 = vmax.f32 %v2144, 0.0
    %v2169 = vmax.f32 %v2146, 0.0
    %v2170 = vmax.f32 %v2150, 0.0
    %v2171 = vmax.f32 %v2152, 0.0
    %v2172 = vmax.f32 %v2154, 0.0
    %v2173 = vmax.f32 %v2156, 0.0
    %v2174 = vadd.f32 %v1478, %v2158
    %v2175 = vadd.f32 %v1479, %v2159
    %v2176 = vadd.f32 %v1480, %v2160
    %v2177 = vadd.f32 %v1481, %v2161
    %v2178 = vadd.f32 %v1482, %v2162
    %v2179 = vadd.f32 %v1483, %v2163
    %v2180 = vadd.f32 %v1484, %v2164
    %v2181 = vadd.f32 %v1485, %v2165
    %v2182 = vadd.f32 %v1486, %v2166
    %v2183 = vadd.f32 %v1487, %v2167
    %v2184 = vadd.f32 %v1488, %v2168
    %v2185 = vadd.f32 %v1489, %v2169
    %v2186 = vadd.f32 %v1490, %v2170
    %v2187 = vadd.f32 %v1491, %v2171
    %v2188 = vadd.f32 %v1492, %v2172
    %v2189 = vadd.f32 %v1493, %v2173
    %2190 = vst [vmem:[#allocation10] sm:$0xff] %v2174
    %2191 = vst [vmem:[#allocation10 + $0x8] sm:$0xff] %v2175
    %2192 = vst [vmem:[#allocation10 + $0x10] sm:$0xff] %v2176
    %2193 = vst [vmem:[#allocation10 + $0x18] sm:$0xff] %v2177
    %2194 = vst [vmem:[#allocation10 + $0x20] sm:$0xff] %v2178
    %2195 = vst [vmem:[#allocation10 + $0x28] sm:$0xff] %v2179
    %2196 = vst [vmem:[#allocation10 + $0x30] sm:$0xff] %v2180
    %2197 = vst [vmem:[#allocation10 + $0x38] sm:$0xff] %v2181
    %2198 = vst [vmem:[#allocation10 + $0x40] sm:$0xff] %v2182
    %2199 = vst [vmem:[#allocation10 + $0x48] sm:$0xff] %v2183
    %2200 = vst [vmem:[#allocation10 + $0x50] sm:$0xff] %v2184
    %2201 = vst [vmem:[#allocation10 + $0x58] sm:$0xff] %v2185
    %2202 = vst [vmem:[#allocation10 + $0x60] sm:$0xff] %v2186
    %2203 = vst [vmem:[#allocation10 + $0x68] sm:$0xff] %v2187
    %2204 = vst [vmem:[#allocation10 + $0x70] sm:$0xff] %v2188
    %2205 = vst [vmem:[#allocation10 + $0x78] sm:$0xff] %v2189
    // Predicated region
    $region82: #{tpu_custom_call.1} parent=1 // pred_check
      _
    $region83: #{tpu_custom_call.1} parent=1 // pred_check_branch
      %2207 = sbr.rel (0) target = $region85
    $region84: #{tpu_custom_call.1} parent=1 // pred_region
      %s2209 = ssub.s32 2048, 2048
      %2210 = vsyncadd [#allocation4], %s2209
      %s2211 = sshll.u32 [#allocation10], 4
      %s2212 = int_to_ptr.vmem [resolvable:$true] %s2211
      %2217 = dma.vmem_to_hbm [thread:$0]  %s2212, 2048, %s16, [#allocation4], 256, 256, 16
    $region85: #{tpu_custom_call.1} parent=1 // pred_fallthru
      _
    // Predicated region
    $region86: #{tpu_custom_call.1} parent=1 // pred_check
      _
    $region87: #{tpu_custom_call.1} parent=1 // pred_check_branch
      %2219 = sbr.rel (0) target = $region89
    $region88: #{tpu_custom_call.1} parent=1 // pred_region
      %2220 = dma.done [#allocation4], 2048
    $region89: #{tpu_custom_call.1} parent=1 // pred_fallthru
      _
    %2221 = vsyncpa [#allocation3], 1
    %2222 = vsyncpa [#allocation6], 1
    %2223 = vsyncpa [#allocation9], 1
    %2224 = vsyncpa [#allocation4], 1

</llo_original>
